<compile_context>
chip_gen: v5e
topology: v5e:2x2
jax: 0.10.0
libtpu: 0.0.40
codegen_flags: <defaults>
</compile_context>

<pallas_src>
import functools

import jax
import jax.numpy as jnp
from jax.experimental import pallas as pl
from jax.experimental.pallas import tpu as pltpu

P_DROP = 0.1


def _hash_u32(x):
    # lowbias32 integer hash: fixed shifts + two 32-bit multiplies.
    x = x ^ (x >> jnp.uint32(16))
    x = x * jnp.uint32(0x7FEB352D)
    x = x ^ (x >> jnp.uint32(15))
    x = x * jnp.uint32(0x846CA68B)
    x = x ^ (x >> jnp.uint32(16))
    return x


def dropout_kernel(seed_ref, x_ref, o_ref, *, drop_threshold, scale):
    rows, cols = x_ref.shape
    # Global linear element index (independent of block_rows / grid choice).
    row0 = pl.program_id(0) * rows
    r = jax.lax.broadcasted_iota(jnp.int32, (rows, cols), 0) + row0
    c = jax.lax.broadcasted_iota(jnp.int32, (rows, cols), 1)
    idx = (r * cols + c).astype(jnp.uint32)
    # Mix user seed in (cheap scalar work, broadcast into the vector xor).
    k = seed_ref[0].astype(jnp.uint32) * jnp.uint32(0x9E3779B1)
    bits = _hash_u32(idx ^ k)
    keep = bits >= jnp.uint32(drop_threshold)      # P(keep) = 1 - p (to 2^-32)
    x = x_ref[...]
    o_ref[...] = jnp.where(keep, x * scale, 0.0).astype(o_ref.dtype)


def dropout(x, seed, p=P_DROP, training=True, block_rows=192):
    """Training-mode dropout matching torch.nn.Dropout(p) forward semantics."""
    if not training or p == 0.0:
        return x  # eval-mode dropout is identity
    orig_shape = x.shape
    C = orig_shape[-1]
    x2 = x.reshape(-1, C)
    R = x2.shape[0]
    if R % block_rows != 0:
        block_rows = R            # fall back to a single whole-array block
    grid = (R // block_rows,)

    seed_arr = jnp.asarray([seed], dtype=jnp.int32)
    kernel = functools.partial(
        dropout_kernel,
        drop_threshold=int(p * (1 << 32)),   # drop iff bits < p * 2^32
        scale=1.0 / (1.0 - p),
    )

    out = pl.pallas_call(
        kernel,
        out_shape=jax.ShapeDtypeStruct((R, C), x.dtype),
        grid_spec=pltpu.PrefetchScalarGridSpec(
            num_scalar_prefetch=1,                       # seed lands in SMEM
            grid=grid,
            in_specs=[pl.BlockSpec((block_rows, C), lambda i, seed: (i, 0))],
            out_specs=pl.BlockSpec((block_rows, C), lambda i, seed: (i, 0)),
        ),
        compiler_params=pltpu.CompilerParams(
            dimension_semantics=("parallel",)),
    )(seed_arr, x2)
    return out.reshape(orig_shape)


if __name__ == "__main__":
    key = jax.random.PRNGKey(0)
    # Shape implied by the module: x109 ~ (1, 384, 768)
    x = jax.random.normal(key, (1, 384, 768), dtype=jnp.float32)

    y = dropout(x, seed=0, p=P_DROP, training=True)
    y = jax.block_until_ready(y)

    # sanity: same shape/dtype, ~10% zeroed, survivors scaled by 1/(1-p)
    assert y.shape == x.shape and y.dtype == x.dtype
    frac_zero = float(jnp.mean(y == 0.0))
    assert 0.05 < frac_zero < 0.20, f"unexpected drop fraction {frac_zero}"
    nz = y != 0.0
    assert bool(jnp.allclose(jnp.where(nz, y, 0.0),
                             jnp.where(nz, x / (1.0 - P_DROP), 0.0),
                             rtol=1e-6, atol=1e-6))

    print("KERNEL_OK")
</pallas_src>

<mosaic_0001>
module attributes {stable_mosaic.version = 11 : i64} {
  func.func @dropout_kernel(%arg0: i32, %arg1: memref<1xi32, #tpu.memory_space<smem>>, %arg2: memref<192x768xf32, #tpu.memory_space<vmem>>, %arg3: memref<192x768xf32, #tpu.memory_space<vmem>>) attributes {dimension_semantics = [#tpu.dimension_semantics<parallel>], iteration_bounds = array<i64: 2>, scalar_prefetch = 1 : i64, scratch_operands = 0 : i64, tpu.core_type = #tpu.core_type<tc>, window_params = [{transform_indices = @transform_0, window_bounds = array<i64: 192, 768>}, {transform_indices = @transform_1, window_bounds = array<i64: 192, 768>}]} {
    %c192_i32 = arith.constant 192 : i32
    %0 = arith.muli %arg0, %c192_i32 : i32
    %1 = tpu.iota {dimensions = array<i32: 0>} : vector<192x768xi32>
    %2 = vector.broadcast %0 : i32 to vector<192x768xi32>
    %3 = arith.addi %1, %2 : vector<192x768xi32>
    %4 = tpu.iota {dimensions = array<i32: 1>} : vector<192x768xi32>
    %c768_i32 = arith.constant 768 : i32
    %5 = vector.broadcast %c768_i32 : i32 to vector<192x768xi32>
    %6 = arith.muli %3, %5 : vector<192x768xi32>
    %7 = arith.addi %6, %4 : vector<192x768xi32>
    %c0 = arith.constant 0 : index
    %8 = memref.load %arg1[%c0] : memref<1xi32, #tpu.memory_space<smem>>
    %c-1640531535_i32 = arith.constant -1640531535 : i32
    %9 = arith.muli %8, %c-1640531535_i32 : i32
    %10 = vector.broadcast %9 : i32 to vector<192x768xi32>
    %11 = arith.xori %7, %10 : vector<192x768xi32>
    %c16_i32 = arith.constant 16 : i32
    %12 = vector.broadcast %c16_i32 : i32 to vector<192x768xi32>
    %13 = arith.shrui %11, %12 : vector<192x768xi32>
    %14 = arith.xori %11, %13 : vector<192x768xi32>
    %c2146121005_i32 = arith.constant 2146121005 : i32
    %15 = vector.broadcast %c2146121005_i32 : i32 to vector<192x768xi32>
    %16 = arith.muli %14, %15 : vector<192x768xi32>
    %c15_i32 = arith.constant 15 : i32
    %17 = vector.broadcast %c15_i32 : i32 to vector<192x768xi32>
    %18 = arith.shrui %16, %17 : vector<192x768xi32>
    %19 = arith.xori %16, %18 : vector<192x768xi32>
    %c-2073254261_i32 = arith.constant -2073254261 : i32
    %20 = vector.broadcast %c-2073254261_i32 : i32 to vector<192x768xi32>
    %21 = arith.muli %19, %20 : vector<192x768xi32>
    %c16_i32_0 = arith.constant 16 : i32
    %22 = vector.broadcast %c16_i32_0 : i32 to vector<192x768xi32>
    %23 = arith.shrui %21, %22 : vector<192x768xi32>
    %24 = arith.xori %21, %23 : vector<192x768xi32>
    %c429496729_i32 = arith.constant 429496729 : i32
    %25 = vector.broadcast %c429496729_i32 : i32 to vector<192x768xi32>
    %26 = arith.cmpi uge, %24, %25 : vector<192x768xi32>
    %c0_1 = arith.constant 0 : index
    %c0_2 = arith.constant 0 : index
    %27 = vector.load %arg2[%c0_1, %c0_2] : memref<192x768xf32, #tpu.memory_space<vmem>>, vector<192x768xf32>
    %cst = arith.constant 1.11111116 : f32
    %28 = vector.broadcast %cst : f32 to vector<192x768xf32>
    %29 = arith.mulf %27, %28 : vector<192x768xf32>
    %cst_3 = arith.constant 0.000000e+00 : f32
    %30 = vector.broadcast %cst_3 : f32 to vector<192x768xf32>
    %31 = arith.select %26, %29, %30 : vector<192x768xi1>, vector<192x768xf32>
    %c0_4 = arith.constant 0 : index
    %c0_5 = arith.constant 0 : index
    %32 = vector.load %arg3[%c0_4, %c0_5] : memref<192x768xf32, #tpu.memory_space<vmem>>, vector<192x768xf32>
    tpu.vector_store %arg3[%c0_4, %c0_5], %31 {strides = array<i32>} : memref<192x768xf32, #tpu.memory_space<vmem>>, vector<192x768xf32>,
    return
  }
  func.func @transform_0(%arg0: i32, %arg1: memref<1xi32, #tpu.memory_space<smem>>) -> (i32, i32) {
    %c0_i32 = arith.constant 0 : i32
    %c0_i32_0 = arith.constant 0 : i32
    return %arg0, %c0_i32 : i32, i32
  }
  func.func @transform_1(%arg0: i32, %arg1: memref<1xi32, #tpu.memory_space<smem>>) -> (i32, i32) {
    %c0_i32 = arith.constant 0 : i32
    %c0_i32_0 = arith.constant 0 : i32
    return %arg0, %c0_i32 : i32, i32
  }
}

</mosaic_0001>

<llo_original>
// kernel: tpu_custom_call.1
$region0: #{tpu_custom_call.1}
  #allocation0 [shape = 'u32[]', space=smem, size = 0x4, offset = 0x4, fixed_abs, tag = 'smem constant byte address 0x4 - core index']
  #allocation1 [shape = 'u32[72,128]{1,0:T(1,128)}', space=vmem, size = 0x9000, scoped, tag = 'internal scratch']
  #allocation2 [shape = 's32[1]{0}', space=sflag, size = 0x4, scoped, tag = 'scoped memory for tpu_custom_call.1']
  #allocation3 [shape = 's32[1]{0:T(128)S(6)}', space=smem, size = 0x200, scoped, tag = 'prefetched SMEM operand 0']
  %s0 = inlined_call_operand.<no memory space> [shape: s32[1], index: 0, kind: input, shape index: {}]
  %s1 = inlined_call_operand.hbm [shape: f32[384,768], index: 1, kind: input, shape index: {}]
  %s2 = inlined_call_operand.hbm [shape: f32[384,768], index: 2, kind: output, shape index: {}]
  %s3 = sld [smem:[#allocation0]]
  $region41: #{tpu_custom_call.1} parent=0
    _
  %s5 = ssub.s32 1, %s3
  %s6 = scalar_select 0, %s5, %s3
  %7 = sst [smem:[#allocation3]] %s0
  $region1: #{tpu_custom_call.1} parent=0
    #allocation4 [shape = 'u8[1179648]{0}', space=vmem, size = 0x120000, scoped, tag = 'input window, operand 1']
    #allocation5 [shape = 's32[2]{0}', space=sflag, size = 0x8, scoped, tag = 'scoped memory for tpu_custom_call.1']
    #allocation6 [shape = 's32[2]{0}', space=sflag, size = 0x8, scoped, tag = 'scoped memory for tpu_custom_call.1']
    #allocation7 [shape = 'u8[1179648]{0}', space=vmem, size = 0x120000, scoped, tag = 'output window, operand 0']
    %8 = vsyncpa [#allocation5], 0
    %s9 = scalar_lea.sflag [#allocation5], 1
    %10 = vsyncpa %s9, 0
    %11 = vsyncpa [#allocation6], 0
    %s12 = scalar_lea.sflag [#allocation6], 1
    %13 = vsyncpa %s12, 0
    loop: start=0, step=1, limit=4
    $region2: #{tpu_custom_call.1} parent=1 // loop_pre_header
      _
    $region3: #{tpu_custom_call.1} parent=1 // loop_header
      %s15 = sphi 0, %s19
      %p16 = scmp.ge.s32.totalorder %s15, 4
      %s25 = sphi 0, %s27
      %s28 = sphi 0, %s25
      %s29 = sphi 0, %s28
      %s45 = sphi 0, %s29
      %s51 = sphi 0, %s53
      %s54 = sphi 0, %s51
      %s55 = sphi 0, %s54
      %s71 = sphi 0, %s55
    $region4: #{tpu_custom_call.1} parent=1 // loop_header_branch
      %18 = sbr.rel (%p16) target = $region8
    $region5: #{tpu_custom_call.1} parent=1 // loop_body
      %s20 = ssub.s32 %s15, 1
      %s21 = ssub.s32 %s15, 2
      %s22 = sadd.s32 %s15, 1
      %s23 = ssub.s32 %s15, %s22
      %p24 = scmp.eq.s32.totalorder %s23, 0
      %s26 = sadd.s32 %s25, 1
      %s27 = scalar_select %p24, %s25, %s26
      %p30 = pneg %p24
      %p31 = scmp.eq.s32.totalorder %s15, 1
      %p32 = por %p30, %p31
      %p33 = scmp.ne.s32.totalorder %s25, %s28
      %p34 = scmp.eq.s32.totalorder %s15, 0
      %p35 = por %p33, %p34
      %p36 = scmp.ne.s32.totalorder %s25, %s28
      %p37 = scmp.eq.s32.totalorder %s20, 1
      %p38 = por %p36, %p37
      %p39 = scmp.ne.s32.totalorder %s28, %s29
      %p40 = scmp.eq.s32.totalorder %s20, 0
      %p41 = por %p39, %p40
      %p42 = scmp.ne.s32.totalorder %s28, %s29
      %p43 = scmp.eq.s32.totalorder %s21, 1
      %p44 = por %p42, %p43
      %p46 = scmp.ne.s32.totalorder %s29, %s45
      %p47 = scmp.eq.s32.totalorder %s21, 0
      %p48 = por %p46, %p47
      %s49 = ssub.s32 %s15, %s22
      %p50 = scmp.eq.s32.totalorder %s49, 0
      %s52 = sadd.s32 %s51, 1
      %s53 = scalar_select %p50, %s51, %s52
      %p56 = pneg %p50
      %p57 = scmp.eq.s32.totalorder %s15, 1
      %p58 = por %p56, %p57
      %p59 = scmp.ne.s32.totalorder %s51, %s54
      %p60 = scmp.eq.s32.totalorder %s15, 0
      %p61 = por %p59, %p60
      %p62 = scmp.ne.s32.totalorder %s51, %s54
      %p63 = scmp.eq.s32.totalorder %s20, 1
      %p64 = por %p62, %p63
      %p65 = scmp.ne.s32.totalorder %s54, %s55
      %p66 = scmp.eq.s32.totalorder %s20, 0
      %p67 = por %p65, %p66
      %p68 = scmp.ne.s32.totalorder %s54, %s55
      %p69 = scmp.eq.s32.totalorder %s21, 1
      %p70 = por %p68, %p69
      %p72 = scmp.ne.s32.totalorder %s55, %s71
      %p73 = scmp.eq.s32.totalorder %s21, 0
      %p74 = por %p72, %p73
      %p75 = scmp.le.s32.totalorder 1, %s15
      %p76 = scmp.lt.s32.totalorder %s15, 3
      %p77 = pnand %p75, %p76
      %p78 = pneg %p77
      // Predicated region
      $region9: #{tpu_custom_call.1} parent=5 // pred_check
        _
      $region10: #{tpu_custom_call.1} parent=5 // pred_check_branch
        %80 = sbr.rel (%p77) target = $region12
      $region11: #{tpu_custom_call.1} parent=5 // pred_region
        %s81 = ssub.s32 %s15, 1
      $region12: #{tpu_custom_call.1} parent=5 // pred_fallthru
        _
      %p82 = scmp.lt.s32.totalorder %s15, 2
      // Predicated region
      $region13: #{tpu_custom_call.1} parent=5 // pred_check
        %p83 = pneg %p82
      $region14: #{tpu_custom_call.1} parent=5 // pred_check_branch
        %85 = sbr.rel (%p83) target = $region16
      $region15: #{tpu_custom_call.1} parent=5 // pred_region
        // Predicated region
        $region17: #{tpu_custom_call.1} parent=15 // pred_check
          %p86 = pneg %p35
        $region18: #{tpu_custom_call.1} parent=15 // pred_check_branch
          %88 = sbr.rel (%p86) target = $region20
        $region19: #{tpu_custom_call.1} parent=15 // pred_region
          %s89 = sand.u32 %s25, 1
          %s90 = scalar_lea.sflag [#allocation5], %s89
          %s91 = sand.u32 %s25, 1
          %s92 = smul.addr %s91, 1152
          %s93 = scalar_lea.vmem [#allocation4], %s92
          %s94 = smul.u32 24, %s15
          %96 = vsyncadd %s90, 0
          %s97 = smul.addr %s94, 6
          %s98 = smul.addr %s97, 8
          %s99 = scalar_lea.hbm %s1, %s98
          %s100 = sshll.u32 %s99, 4
          %s101 = int_to_ptr.hbm [resolvable:$true] %s100
          %s102 = sshll.u32 %s93, 4
          %s103 = int_to_ptr.vmem [resolvable:$true] %s102
          %108 = dma.hbm_to_vmem [thread:$0]  %s101, 18432, %s103, %s90, 768, 768, 48
        $region20: #{tpu_custom_call.1} parent=15 // pred_fallthru
          _
      $region16: #{tpu_custom_call.1} parent=5 // pred_fallthru
        _
      %p109 = scmp.le.s32.totalorder 1, %s15
      %p110 = scmp.lt.s32.totalorder %s15, 3
      %p111 = pnand %p109, %p110
      %p112 = pneg %p111
      // Predicated region
      $region21: #{tpu_custom_call.1} parent=5 // pred_check
        _
      $region22: #{tpu_custom_call.1} parent=5 // pred_check_branch
        %114 = sbr.rel (%p111) target = $region24
      $region23: #{tpu_custom_call.1} parent=5 // pred_region
        %s115 = ssub.s32 %s15, 1
        %s116 = sand.u32 %s28, 1
        %s117 = scalar_lea.sflag [#allocation5], %s116
        %s118 = sand.u32 %s28, 1
        %s119 = smul.addr %s118, 1152
        %s120 = scalar_lea.vmem [#allocation4], %s119
        // Predicated region
        $region25: #{tpu_custom_call.1} parent=23 // pred_check
          %p121 = pneg %p41
        $region26: #{tpu_custom_call.1} parent=23 // pred_check_branch
          %123 = sbr.rel (%p121) target = $region28
        $region27: #{tpu_custom_call.1} parent=23 // pred_region
          %125 = dma.done %s117, 18432
        $region28: #{tpu_custom_call.1} parent=23 // pred_fallthru
          _
        %s126 = sand.u32 %s28, 1
        %s127 = scalar_lea.sflag [#allocation5], %s126
        %s128 = sand.u32 %s28, 1
        %s129 = smul.addr %s128, 1152
        %s130 = scalar_lea.vmem [#allocation4], %s129
        %p131 = pneg %p41
        %p132 = pneg %p38
        %p133 = pneg %p67
        %p134 = pneg %p64
        %s135 = sand.u32 %s54, 1
        %s136 = scalar_lea.sflag [#allocation6], %s135
        %s137 = sand.u32 %s54, 1
        %s138 = smul.addr %s137, 1152
        %s139 = scalar_lea.vmem [#allocation7], %s138
        %s140 = smul.u32 24, %s20
        %s141 = smul.u32 24, %s20
        %s142 = smul.u32 %s20, 192
        %v143 = vlaneseq
        %v144 = vshrl.u32 %v143, 7
        %v145 = vadd.s32 %v144, 8
        %v146 = vadd.s32 %v144, 16
        %v147 = vadd.s32 %v144, 24
        %v148 = vadd.s32 %v144, 32
        %v149 = vadd.s32 %v144, 40
        %v150 = vadd.s32 %v144, 48
        %v151 = vadd.s32 %v144, 56
        %v152 = vadd.s32 %v144, 64
        %v153 = vadd.s32 %v144, 72
        %v154 = vadd.s32 %v144, 80
        %v155 = vadd.s32 %v144, 88
        %v156 = vadd.s32 %v144, 96
        %v157 = vadd.s32 %v144, 104
        %v158 = vadd.s32 %v144, 112
        %v159 = vadd.s32 %v144, 120
        %v160 = vadd.s32 %v144, 128
        %v161 = vadd.s32 %v144, 136
        %v162 = vadd.s32 %v144, 144
        %v163 = vadd.s32 %v144, 152
        %v164 = vadd.s32 %v144, 160
        %v165 = vadd.s32 %v144, 168
        %v166 = vadd.s32 %v144, 176
        %v167 = vadd.s32 %v144, 184
        %v168 = vstv %s142
        %v169 = vadd.s32 %v144, %v168
        %v170 = vadd.s32 %v145, %v168
        %v171 = vadd.s32 %v146, %v168
        %v172 = vadd.s32 %v147, %v168
        %v173 = vadd.s32 %v148, %v168
        %v174 = vadd.s32 %v149, %v168
        %v175 = vadd.s32 %v150, %v168
        %v176 = vadd.s32 %v151, %v168
        %v177 = vadd.s32 %v152, %v168
        %v178 = vadd.s32 %v153, %v168
        %v179 = vadd.s32 %v154, %v168
        %v180 = vadd.s32 %v155, %v168
        %v181 = vadd.s32 %v156, %v168
        %v182 = vadd.s32 %v157, %v168
        %v183 = vadd.s32 %v158, %v168
        %v184 = vadd.s32 %v159, %v168
        %v185 = vadd.s32 %v160, %v168
        %v186 = vadd.s32 %v161, %v168
        %v187 = vadd.s32 %v162, %v168
        %v188 = vadd.s32 %v163, %v168
        %v189 = vadd.s32 %v164, %v168
        %v190 = vadd.s32 %v165, %v168
        %v191 = vadd.s32 %v166, %v168
        %v192 = vadd.s32 %v167, %v168
        %v193 = vlaneseq
        %v194 = vand.u32 %v193, 127
        %v195 = vadd.s32 %v194, 128
        %v196 = vadd.s32 %v194, 256
        %v197 = vadd.s32 %v194, 384
        %v198 = vadd.s32 %v194, 512
        %v199 = vadd.s32 %v194, 640
        %v200 = vmul.u32 %v169, 768
        %v201 = vmul.u32 %v170, 768
        %v202 = vmul.u32 %v171, 768
        %v203 = vmul.u32 %v172, 768
        %v204 = vmul.u32 %v173, 768
        %v205 = vmul.u32 %v174, 768
        %v206 = vmul.u32 %v175, 768
        %v207 = vmul.u32 %v176, 768
        %v208 = vmul.u32 %v177, 768
        %v209 = vmul.u32 %v178, 768
        %v210 = vmul.u32 %v179, 768
        %v211 = vmul.u32 %v180, 768
        %v212 = vmul.u32 %v181, 768
        %v213 = vmul.u32 %v182, 768
        %v214 = vmul.u32 %v183, 768
        %v215 = vmul.u32 %v184, 768
        %v216 = vmul.u32 %v185, 768
        %v217 = vmul.u32 %v186, 768
        %v218 = vmul.u32 %v187, 768
        %v219 = vmul.u32 %v188, 768
        %v220 = vmul.u32 %v189, 768
        %v221 = vmul.u32 %v190, 768
        %v222 = vmul.u32 %v191, 768
        %v223 = vmul.u32 %v192, 768
        %v224 = vadd.s32 %v200, %v194
        %v225 = vadd.s32 %v200, %v195
        %v226 = vadd.s32 %v200, %v196
        %v227 = vadd.s32 %v200, %v197
        %v228 = vadd.s32 %v200, %v198
        %v229 = vadd.s32 %v200, %v199
        %v230 = vadd.s32 %v201, %v194
        %v231 = vadd.s32 %v201, %v195
        %v232 = vadd.s32 %v201, %v196
        %v233 = vadd.s32 %v201, %v197
        %v234 = vadd.s32 %v201, %v198
        %v235 = vadd.s32 %v201, %v199
        %v236 = vadd.s32 %v202, %v194
        %v237 = vadd.s32 %v202, %v195
        %v238 = vadd.s32 %v202, %v196
        %v239 = vadd.s32 %v202, %v197
        %v240 = vadd.s32 %v202, %v198
        %v241 = vadd.s32 %v202, %v199
        %v242 = vadd.s32 %v203, %v194
        %v243 = vadd.s32 %v203, %v195
        %v244 = vadd.s32 %v203, %v196
        %v245 = vadd.s32 %v203, %v197
        %v246 = vadd.s32 %v203, %v198
        %v247 = vadd.s32 %v203, %v199
        %v248 = vadd.s32 %v204, %v194
        %v249 = vadd.s32 %v204, %v195
        %v250 = vadd.s32 %v204, %v196
        %v251 = vadd.s32 %v204, %v197
        %v252 = vadd.s32 %v204, %v198
        %v253 = vadd.s32 %v204, %v199
        %v254 = vadd.s32 %v205, %v194
        %v255 = vadd.s32 %v205, %v195
        %v256 = vadd.s32 %v205, %v196
        %v257 = vadd.s32 %v205, %v197
        %v258 = vadd.s32 %v205, %v198
        %v259 = vadd.s32 %v205, %v199
        %v260 = vadd.s32 %v206, %v194
        %v261 = vadd.s32 %v206, %v195
        %v262 = vadd.s32 %v206, %v196
        %v263 = vadd.s32 %v206, %v197
        %v264 = vadd.s32 %v206, %v198
        %v265 = vadd.s32 %v206, %v199
        %v266 = vadd.s32 %v207, %v194
        %v267 = vadd.s32 %v207, %v195
        %v268 = vadd.s32 %v207, %v196
        %v269 = vadd.s32 %v207, %v197
        %v270 = vadd.s32 %v207, %v198
        %v271 = vadd.s32 %v207, %v199
        %v272 = vadd.s32 %v208, %v194
        %v273 = vadd.s32 %v208, %v195
        %v274 = vadd.s32 %v208, %v196
        %v275 = vadd.s32 %v208, %v197
        %v276 = vadd.s32 %v208, %v198
        %v277 = vadd.s32 %v208, %v199
        %v278 = vadd.s32 %v209, %v194
        %v279 = vadd.s32 %v209, %v195
        %v280 = vadd.s32 %v209, %v196
        %v281 = vadd.s32 %v209, %v197
        %v282 = vadd.s32 %v209, %v198
        %v283 = vadd.s32 %v209, %v199
        %v284 = vadd.s32 %v210, %v194
        %v285 = vadd.s32 %v210, %v195
        %v286 = vadd.s32 %v210, %v196
        %v287 = vadd.s32 %v210, %v197
        %v288 = vadd.s32 %v210, %v198
        %v289 = vadd.s32 %v210, %v199
        %v290 = vadd.s32 %v211, %v194
        %v291 = vadd.s32 %v211, %v195
        %v292 = vadd.s32 %v211, %v196
        %v293 = vadd.s32 %v211, %v197
        %v294 = vadd.s32 %v211, %v198
        %v295 = vadd.s32 %v211, %v199
        %v296 = vadd.s32 %v212, %v194
        %v297 = vadd.s32 %v212, %v195
        %v298 = vadd.s32 %v212, %v196
        %v299 = vadd.s32 %v212, %v197
        %v300 = vadd.s32 %v212, %v198
        %v301 = vadd.s32 %v212, %v199
        %v302 = vadd.s32 %v213, %v194
        %v303 = vadd.s32 %v213, %v195
        %v304 = vadd.s32 %v213, %v196
        %v305 = vadd.s32 %v213, %v197
        %v306 = vadd.s32 %v213, %v198
        %v307 = vadd.s32 %v213, %v199
        %v308 = vadd.s32 %v214, %v194
        %v309 = vadd.s32 %v214, %v195
        %v310 = vadd.s32 %v214, %v196
        %v311 = vadd.s32 %v214, %v197
        %v312 = vadd.s32 %v214, %v198
        %v313 = vadd.s32 %v214, %v199
        %v314 = vadd.s32 %v215, %v194
        %v315 = vadd.s32 %v215, %v195
        %v316 = vadd.s32 %v215, %v196
        %v317 = vadd.s32 %v215, %v197
        %v318 = vadd.s32 %v215, %v198
        %v319 = vadd.s32 %v215, %v199
        %v320 = vadd.s32 %v216, %v194
        %v321 = vadd.s32 %v216, %v195
        %v322 = vadd.s32 %v216, %v196
        %v323 = vadd.s32 %v216, %v197
        %v324 = vadd.s32 %v216, %v198
        %v325 = vadd.s32 %v216, %v199
        %v326 = vadd.s32 %v217, %v194
        %v327 = vadd.s32 %v217, %v195
        %v328 = vadd.s32 %v217, %v196
        %v329 = vadd.s32 %v217, %v197
        %v330 = vadd.s32 %v217, %v198
        %v331 = vadd.s32 %v217, %v199
        %v332 = vadd.s32 %v218, %v194
        %v333 = vadd.s32 %v218, %v195
        %v334 = vadd.s32 %v218, %v196
        %v335 = vadd.s32 %v218, %v197
        %v336 = vadd.s32 %v218, %v198
        %v337 = vadd.s32 %v218, %v199
        %v338 = vadd.s32 %v219, %v194
        %v339 = vadd.s32 %v219, %v195
        %v340 = vadd.s32 %v219, %v196
        %v341 = vadd.s32 %v219, %v197
        %v342 = vadd.s32 %v219, %v198
        %v343 = vadd.s32 %v219, %v199
        %v344 = vadd.s32 %v220, %v194
        %v345 = vadd.s32 %v220, %v195
        %v346 = vadd.s32 %v220, %v196
        %v347 = vadd.s32 %v220, %v197
        %v348 = vadd.s32 %v220, %v198
        %v349 = vadd.s32 %v220, %v199
        %v350 = vadd.s32 %v221, %v194
        %v351 = vadd.s32 %v221, %v195
        %v352 = vadd.s32 %v221, %v196
        %v353 = vadd.s32 %v221, %v197
        %v354 = vadd.s32 %v221, %v198
        %v355 = vadd.s32 %v221, %v199
        %v356 = vadd.s32 %v222, %v194
        %v357 = vadd.s32 %v222, %v195
        %v358 = vadd.s32 %v222, %v196
        %v359 = vadd.s32 %v222, %v197
        %v360 = vadd.s32 %v222, %v198
        %v361 = vadd.s32 %v222, %v199
        %v362 = vadd.s32 %v223, %v194
        %v363 = vadd.s32 %v223, %v195
        %v364 = vadd.s32 %v223, %v196
        %v365 = vadd.s32 %v223, %v197
        %v366 = vadd.s32 %v223, %v198
        %v367 = vadd.s32 %v223, %v199
        %s368 = sld [smem:[#allocation3]]
        %s369 = smul.u32 %s368, 2654435761
        %v370 = vstv %s369
        %v371 = vxor.u32 %v224, %v370
        %v372 = vxor.u32 %v225, %v370
        %v373 = vxor.u32 %v226, %v370
        %v374 = vxor.u32 %v227, %v370
        %v375 = vxor.u32 %v228, %v370
        %v376 = vxor.u32 %v229, %v370
        %v377 = vxor.u32 %v230, %v370
        %v378 = vxor.u32 %v231, %v370
        %v379 = vxor.u32 %v232, %v370
        %v380 = vxor.u32 %v233, %v370
        %v381 = vxor.u32 %v234, %v370
        %v382 = vxor.u32 %v235, %v370
        %v383 = vxor.u32 %v236, %v370
        %v384 = vxor.u32 %v237, %v370
        %v385 = vxor.u32 %v238, %v370
        %v386 = vxor.u32 %v239, %v370
        %v387 = vxor.u32 %v240, %v370
        %v388 = vxor.u32 %v241, %v370
        %v389 = vxor.u32 %v242, %v370
        %v390 = vxor.u32 %v243, %v370
        %v391 = vxor.u32 %v244, %v370
        %v392 = vxor.u32 %v245, %v370
        %v393 = vxor.u32 %v246, %v370
        %v394 = vxor.u32 %v247, %v370
        %v395 = vxor.u32 %v248, %v370
        %v396 = vxor.u32 %v249, %v370
        %v397 = vxor.u32 %v250, %v370
        %v398 = vxor.u32 %v251, %v370
        %v399 = vxor.u32 %v252, %v370
        %v400 = vxor.u32 %v253, %v370
        %v401 = vxor.u32 %v254, %v370
        %v402 = vxor.u32 %v255, %v370
        %v403 = vxor.u32 %v256, %v370
        %v404 = vxor.u32 %v257, %v370
        %v405 = vxor.u32 %v258, %v370
        %v406 = vxor.u32 %v259, %v370
        %v407 = vxor.u32 %v260, %v370
        %v408 = vxor.u32 %v261, %v370
        %v409 = vxor.u32 %v262, %v370
        %v410 = vxor.u32 %v263, %v370
        %v411 = vxor.u32 %v264, %v370
        %v412 = vxor.u32 %v265, %v370
        %v413 = vxor.u32 %v266, %v370
        %v414 = vxor.u32 %v267, %v370
        %v415 = vxor.u32 %v268, %v370
        %v416 = vxor.u32 %v269, %v370
        %v417 = vxor.u32 %v270, %v370
        %v418 = vxor.u32 %v271, %v370
        %v419 = vxor.u32 %v272, %v370
        %v420 = vxor.u32 %v273, %v370
        %v421 = vxor.u32 %v274, %v370
        %v422 = vxor.u32 %v275, %v370
        %v423 = vxor.u32 %v276, %v370
        %v424 = vxor.u32 %v277, %v370
        %v425 = vxor.u32 %v278, %v370
        %v426 = vxor.u32 %v279, %v370
        %v427 = vxor.u32 %v280, %v370
        %v428 = vxor.u32 %v281, %v370
        %v429 = vxor.u32 %v282, %v370
        %v430 = vxor.u32 %v283, %v370
        %v431 = vxor.u32 %v284, %v370
        %v432 = vxor.u32 %v285, %v370
        %v433 = vxor.u32 %v286, %v370
        %v434 = vxor.u32 %v287, %v370
        %v435 = vxor.u32 %v288, %v370
        %v436 = vxor.u32 %v289, %v370
        %v437 = vxor.u32 %v290, %v370
        %v438 = vxor.u32 %v291, %v370
        %v439 = vxor.u32 %v292, %v370
        %v440 = vxor.u32 %v293, %v370
        %v441 = vxor.u32 %v294, %v370
        %v442 = vxor.u32 %v295, %v370
        %v443 = vxor.u32 %v296, %v370
        %v444 = vxor.u32 %v297, %v370
        %v445 = vxor.u32 %v298, %v370
        %v446 = vxor.u32 %v299, %v370
        %v447 = vxor.u32 %v300, %v370
        %v448 = vxor.u32 %v301, %v370
        %v449 = vxor.u32 %v302, %v370
        %v450 = vxor.u32 %v303, %v370
        %v451 = vxor.u32 %v304, %v370
        %v452 = vxor.u32 %v305, %v370
        %v453 = vxor.u32 %v306, %v370
        %v454 = vxor.u32 %v307, %v370
        %v455 = vxor.u32 %v308, %v370
        %v456 = vxor.u32 %v309, %v370
        %v457 = vxor.u32 %v310, %v370
        %v458 = vxor.u32 %v311, %v370
        %v459 = vxor.u32 %v312, %v370
        %v460 = vxor.u32 %v313, %v370
        %v461 = vxor.u32 %v314, %v370
        %v462 = vxor.u32 %v315, %v370
        %v463 = vxor.u32 %v316, %v370
        %v464 = vxor.u32 %v317, %v370
        %v465 = vxor.u32 %v318, %v370
        %v466 = vxor.u32 %v319, %v370
        %v467 = vxor.u32 %v320, %v370
        %v468 = vxor.u32 %v321, %v370
        %v469 = vxor.u32 %v322, %v370
        %v470 = vxor.u32 %v323, %v370
        %v471 = vxor.u32 %v324, %v370
        %v472 = vxor.u32 %v325, %v370
        %v473 = vxor.u32 %v326, %v370
        %v474 = vxor.u32 %v327, %v370
        %v475 = vxor.u32 %v328, %v370
        %v476 = vxor.u32 %v329, %v370
        %v477 = vxor.u32 %v330, %v370
        %v478 = vxor.u32 %v331, %v370
        %v479 = vxor.u32 %v332, %v370
        %v480 = vxor.u32 %v333, %v370
        %v481 = vxor.u32 %v334, %v370
        %v482 = vxor.u32 %v335, %v370
        %v483 = vxor.u32 %v336, %v370
        %v484 = vxor.u32 %v337, %v370
        %v485 = vxor.u32 %v338, %v370
        %v486 = vxor.u32 %v339, %v370
        %v487 = vxor.u32 %v340, %v370
        %v488 = vxor.u32 %v341, %v370
        %v489 = vxor.u32 %v342, %v370
        %v490 = vxor.u32 %v343, %v370
        %v491 = vxor.u32 %v344, %v370
        %v492 = vxor.u32 %v345, %v370
        %v493 = vxor.u32 %v346, %v370
        %v494 = vxor.u32 %v347, %v370
        %v495 = vxor.u32 %v348, %v370
        %v496 = vxor.u32 %v349, %v370
        %v497 = vxor.u32 %v350, %v370
        %v498 = vxor.u32 %v351, %v370
        %v499 = vxor.u32 %v352, %v370
        %v500 = vxor.u32 %v353, %v370
        %v501 = vxor.u32 %v354, %v370
        %v502 = vxor.u32 %v355, %v370
        %v503 = vxor.u32 %v356, %v370
        %v504 = vxor.u32 %v357, %v370
        %v505 = vxor.u32 %v358, %v370
        %v506 = vxor.u32 %v359, %v370
        %v507 = vxor.u32 %v360, %v370
        %v508 = vxor.u32 %v361, %v370
        %v509 = vxor.u32 %v362, %v370
        %v510 = vxor.u32 %v363, %v370
        %v511 = vxor.u32 %v364, %v370
        %v512 = vxor.u32 %v365, %v370
        %v513 = vxor.u32 %v366, %v370
        %v514 = vxor.u32 %v367, %v370
        %v515 = vshrl.u32 %v371, 16
        %v516 = vshrl.u32 %v372, 16
        %v517 = vshrl.u32 %v373, 16
        %v518 = vshrl.u32 %v374, 16
        %v519 = vshrl.u32 %v375, 16
        %v520 = vshrl.u32 %v376, 16
        %v521 = vshrl.u32 %v377, 16
        %v522 = vshrl.u32 %v378, 16
        %v523 = vshrl.u32 %v379, 16
        %v524 = vshrl.u32 %v380, 16
        %v525 = vshrl.u32 %v381, 16
        %v526 = vshrl.u32 %v382, 16
        %v527 = vshrl.u32 %v383, 16
        %v528 = vshrl.u32 %v384, 16
        %v529 = vshrl.u32 %v385, 16
        %v530 = vshrl.u32 %v386, 16
        %v531 = vshrl.u32 %v387, 16
        %v532 = vshrl.u32 %v388, 16
        %v533 = vshrl.u32 %v389, 16
        %v534 = vshrl.u32 %v390, 16
        %v535 = vshrl.u32 %v391, 16
        %v536 = vshrl.u32 %v392, 16
        %v537 = vshrl.u32 %v393, 16
        %v538 = vshrl.u32 %v394, 16
        %v539 = vshrl.u32 %v395, 16
        %v540 = vshrl.u32 %v396, 16
        %v541 = vshrl.u32 %v397, 16
        %v542 = vshrl.u32 %v398, 16
        %v543 = vshrl.u32 %v399, 16
        %v544 = vshrl.u32 %v400, 16
        %v545 = vshrl.u32 %v401, 16
        %v546 = vshrl.u32 %v402, 16
        %v547 = vshrl.u32 %v403, 16
        %v548 = vshrl.u32 %v404, 16
        %v549 = vshrl.u32 %v405, 16
        %v550 = vshrl.u32 %v406, 16
        %v551 = vshrl.u32 %v407, 16
        %v552 = vshrl.u32 %v408, 16
        %v553 = vshrl.u32 %v409, 16
        %v554 = vshrl.u32 %v410, 16
        %v555 = vshrl.u32 %v411, 16
        %v556 = vshrl.u32 %v412, 16
        %v557 = vshrl.u32 %v413, 16
        %v558 = vshrl.u32 %v414, 16
        %v559 = vshrl.u32 %v415, 16
        %v560 = vshrl.u32 %v416, 16
        %v561 = vshrl.u32 %v417, 16
        %v562 = vshrl.u32 %v418, 16
        %v563 = vshrl.u32 %v419, 16
        %v564 = vshrl.u32 %v420, 16
        %v565 = vshrl.u32 %v421, 16
        %v566 = vshrl.u32 %v422, 16
        %v567 = vshrl.u32 %v423, 16
        %v568 = vshrl.u32 %v424, 16
        %v569 = vshrl.u32 %v425, 16
        %v570 = vshrl.u32 %v426, 16
        %v571 = vshrl.u32 %v427, 16
        %v572 = vshrl.u32 %v428, 16
        %v573 = vshrl.u32 %v429, 16
        %v574 = vshrl.u32 %v430, 16
        %v575 = vshrl.u32 %v431, 16
        %v576 = vshrl.u32 %v432, 16
        %v577 = vshrl.u32 %v433, 16
        %v578 = vshrl.u32 %v434, 16
        %v579 = vshrl.u32 %v435, 16
        %v580 = vshrl.u32 %v436, 16
        %v581 = vshrl.u32 %v437, 16
        %v582 = vshrl.u32 %v438, 16
        %v583 = vshrl.u32 %v439, 16
        %v584 = vshrl.u32 %v440, 16
        %v585 = vshrl.u32 %v441, 16
        %v586 = vshrl.u32 %v442, 16
        %v587 = vshrl.u32 %v443, 16
        %v588 = vshrl.u32 %v444, 16
        %v589 = vshrl.u32 %v445, 16
        %v590 = vshrl.u32 %v446, 16
        %v591 = vshrl.u32 %v447, 16
        %v592 = vshrl.u32 %v448, 16
        %v593 = vshrl.u32 %v449, 16
        %v594 = vshrl.u32 %v450, 16
        %v595 = vshrl.u32 %v451, 16
        %v596 = vshrl.u32 %v452, 16
        %v597 = vshrl.u32 %v453, 16
        %v598 = vshrl.u32 %v454, 16
        %v599 = vshrl.u32 %v455, 16
        %v600 = vshrl.u32 %v456, 16
        %v601 = vshrl.u32 %v457, 16
        %v602 = vshrl.u32 %v458, 16
        %v603 = vshrl.u32 %v459, 16
        %v604 = vshrl.u32 %v460, 16
        %v605 = vshrl.u32 %v461, 16
        %v606 = vshrl.u32 %v462, 16
        %v607 = vshrl.u32 %v463, 16
        %v608 = vshrl.u32 %v464, 16
        %v609 = vshrl.u32 %v465, 16
        %v610 = vshrl.u32 %v466, 16
        %v611 = vshrl.u32 %v467, 16
        %v612 = vshrl.u32 %v468, 16
        %v613 = vshrl.u32 %v469, 16
        %v614 = vshrl.u32 %v470, 16
        %v615 = vshrl.u32 %v471, 16
        %v616 = vshrl.u32 %v472, 16
        %v617 = vshrl.u32 %v473, 16
        %v618 = vshrl.u32 %v474, 16
        %v619 = vshrl.u32 %v475, 16
        %v620 = vshrl.u32 %v476, 16
        %v621 = vshrl.u32 %v477, 16
        %v622 = vshrl.u32 %v478, 16
        %v623 = vshrl.u32 %v479, 16
        %v624 = vshrl.u32 %v480, 16
        %v625 = vshrl.u32 %v481, 16
        %v626 = vshrl.u32 %v482, 16
        %v627 = vshrl.u32 %v483, 16
        %v628 = vshrl.u32 %v484, 16
        %v629 = vshrl.u32 %v485, 16
        %v630 = vshrl.u32 %v486, 16
        %v631 = vshrl.u32 %v487, 16
        %v632 = vshrl.u32 %v488, 16
        %v633 = vshrl.u32 %v489, 16
        %v634 = vshrl.u32 %v490, 16
        %v635 = vshrl.u32 %v491, 16
        %v636 = vshrl.u32 %v492, 16
        %v637 = vshrl.u32 %v493, 16
        %v638 = vshrl.u32 %v494, 16
        %v639 = vshrl.u32 %v495, 16
        %v640 = vshrl.u32 %v496, 16
        %v641 = vshrl.u32 %v497, 16
        %v642 = vshrl.u32 %v498, 16
        %v643 = vshrl.u32 %v499, 16
        %v644 = vshrl.u32 %v500, 16
        %v645 = vshrl.u32 %v501, 16
        %v646 = vshrl.u32 %v502, 16
        %v647 = vshrl.u32 %v503, 16
        %v648 = vshrl.u32 %v504, 16
        %v649 = vshrl.u32 %v505, 16
        %v650 = vshrl.u32 %v506, 16
        %v651 = vshrl.u32 %v507, 16
        %v652 = vshrl.u32 %v508, 16
        %v653 = vshrl.u32 %v509, 16
        %v654 = vshrl.u32 %v510, 16
        %v655 = vshrl.u32 %v511, 16
        %v656 = vshrl.u32 %v512, 16
        %v657 = vshrl.u32 %v513, 16
        %v658 = vshrl.u32 %v514, 16
        %v659 = vxor.u32 %v371, %v515
        %v660 = vxor.u32 %v372, %v516
        %v661 = vxor.u32 %v373, %v517
        %v662 = vxor.u32 %v374, %v518
        %v663 = vxor.u32 %v375, %v519
        %v664 = vxor.u32 %v376, %v520
        %v665 = vxor.u32 %v377, %v521
        %v666 = vxor.u32 %v378, %v522
        %v667 = vxor.u32 %v379, %v523
        %v668 = vxor.u32 %v380, %v524
        %v669 = vxor.u32 %v381, %v525
        %v670 = vxor.u32 %v382, %v526
        %v671 = vxor.u32 %v383, %v527
        %v672 = vxor.u32 %v384, %v528
        %v673 = vxor.u32 %v385, %v529
        %v674 = vxor.u32 %v386, %v530
        %v675 = vxor.u32 %v387, %v531
        %v676 = vxor.u32 %v388, %v532
        %v677 = vxor.u32 %v389, %v533
        %v678 = vxor.u32 %v390, %v534
        %v679 = vxor.u32 %v391, %v535
        %v680 = vxor.u32 %v392, %v536
        %v681 = vxor.u32 %v393, %v537
        %v682 = vxor.u32 %v394, %v538
        %v683 = vxor.u32 %v395, %v539
        %v684 = vxor.u32 %v396, %v540
        %v685 = vxor.u32 %v397, %v541
        %v686 = vxor.u32 %v398, %v542
        %v687 = vxor.u32 %v399, %v543
        %v688 = vxor.u32 %v400, %v544
        %v689 = vxor.u32 %v401, %v545
        %v690 = vxor.u32 %v402, %v546
        %v691 = vxor.u32 %v403, %v547
        %v692 = vxor.u32 %v404, %v548
        %v693 = vxor.u32 %v405, %v549
        %v694 = vxor.u32 %v406, %v550
        %v695 = vxor.u32 %v407, %v551
        %v696 = vxor.u32 %v408, %v552
        %v697 = vxor.u32 %v409, %v553
        %v698 = vxor.u32 %v410, %v554
        %v699 = vxor.u32 %v411, %v555
        %v700 = vxor.u32 %v412, %v556
        %v701 = vxor.u32 %v413, %v557
        %v702 = vxor.u32 %v414, %v558
        %v703 = vxor.u32 %v415, %v559
        %v704 = vxor.u32 %v416, %v560
        %v705 = vxor.u32 %v417, %v561
        %v706 = vxor.u32 %v418, %v562
        %v707 = vxor.u32 %v419, %v563
        %v708 = vxor.u32 %v420, %v564
        %v709 = vxor.u32 %v421, %v565
        %v710 = vxor.u32 %v422, %v566
        %v711 = vxor.u32 %v423, %v567
        %v712 = vxor.u32 %v424, %v568
        %v713 = vxor.u32 %v425, %v569
        %v714 = vxor.u32 %v426, %v570
        %v715 = vxor.u32 %v427, %v571
        %v716 = vxor.u32 %v428, %v572
        %v717 = vxor.u32 %v429, %v573
        %v718 = vxor.u32 %v430, %v574
        %v719 = vxor.u32 %v431, %v575
        %v720 = vxor.u32 %v432, %v576
        %v721 = vxor.u32 %v433, %v577
        %v722 = vxor.u32 %v434, %v578
        %v723 = vxor.u32 %v435, %v579
        %v724 = vxor.u32 %v436, %v580
        %v725 = vxor.u32 %v437, %v581
        %v726 = vxor.u32 %v438, %v582
        %v727 = vxor.u32 %v439, %v583
        %v728 = vxor.u32 %v440, %v584
        %v729 = vxor.u32 %v441, %v585
        %v730 = vxor.u32 %v442, %v586
        %v731 = vxor.u32 %v443, %v587
        %v732 = vxor.u32 %v444, %v588
        %v733 = vxor.u32 %v445, %v589
        %v734 = vxor.u32 %v446, %v590
        %v735 = vxor.u32 %v447, %v591
        %v736 = vxor.u32 %v448, %v592
        %v737 = vxor.u32 %v449, %v593
        %v738 = vxor.u32 %v450, %v594
        %v739 = vxor.u32 %v451, %v595
        %v740 = vxor.u32 %v452, %v596
        %v741 = vxor.u32 %v453, %v597
        %v742 = vxor.u32 %v454, %v598
        %v743 = vxor.u32 %v455, %v599
        %v744 = vxor.u32 %v456, %v600
        %v745 = vxor.u32 %v457, %v601
        %v746 = vxor.u32 %v458, %v602
        %v747 = vxor.u32 %v459, %v603
        %v748 = vxor.u32 %v460, %v604
        %v749 = vxor.u32 %v461, %v605
        %v750 = vxor.u32 %v462, %v606
        %v751 = vxor.u32 %v463, %v607
        %v752 = vxor.u32 %v464, %v608
        %v753 = vxor.u32 %v465, %v609
        %v754 = vxor.u32 %v466, %v610
        %v755 = vxor.u32 %v467, %v611
        %v756 = vxor.u32 %v468, %v612
        %v757 = vxor.u32 %v469, %v613
        %v758 = vxor.u32 %v470, %v614
        %v759 = vxor.u32 %v471, %v615
        %v760 = vxor.u32 %v472, %v616
        %v761 = vxor.u32 %v473, %v617
        %v762 = vxor.u32 %v474, %v618
        %v763 = vxor.u32 %v475, %v619
        %v764 = vxor.u32 %v476, %v620
        %v765 = vxor.u32 %v477, %v621
        %v766 = vxor.u32 %v478, %v622
        %v767 = vxor.u32 %v479, %v623
        %v768 = vxor.u32 %v480, %v624
        %v769 = vxor.u32 %v481, %v625
        %v770 = vxor.u32 %v482, %v626
        %v771 = vxor.u32 %v483, %v627
        %v772 = vxor.u32 %v484, %v628
        %v773 = vxor.u32 %v485, %v629
        %v774 = vxor.u32 %v486, %v630
        %v775 = vxor.u32 %v487, %v631
        %v776 = vxor.u32 %v488, %v632
        %v777 = vxor.u32 %v489, %v633
        %v778 = vxor.u32 %v490, %v634
        %v779 = vxor.u32 %v491, %v635
        %v780 = vxor.u32 %v492, %v636
        %v781 = vxor.u32 %v493, %v637
        %v782 = vxor.u32 %v494, %v638
        %v783 = vxor.u32 %v495, %v639
        %v784 = vxor.u32 %v496, %v640
        %v785 = vxor.u32 %v497, %v641
        %v786 = vxor.u32 %v498, %v642
        %v787 = vxor.u32 %v499, %v643
        %v788 = vxor.u32 %v500, %v644
        %v789 = vxor.u32 %v501, %v645
        %v790 = vxor.u32 %v502, %v646
        %v791 = vxor.u32 %v503, %v647
        %v792 = vxor.u32 %v504, %v648
        %v793 = vxor.u32 %v505, %v649
        %v794 = vxor.u32 %v506, %v650
        %v795 = vxor.u32 %v507, %v651
        %v796 = vxor.u32 %v508, %v652
        %v797 = vxor.u32 %v509, %v653
        %v798 = vxor.u32 %v510, %v654
        %v799 = vxor.u32 %v511, %v655
        %v800 = vxor.u32 %v512, %v656
        %v801 = vxor.u32 %v513, %v657
        %v802 = vxor.u32 %v514, %v658
        %v803 = vmul.u32 %v659, 2146121005
        %v804 = vmul.u32 %v660, 2146121005
        %v805 = vmul.u32 %v661, 2146121005
        %v806 = vmul.u32 %v662, 2146121005
        %v807 = vmul.u32 %v663, 2146121005
        %v808 = vmul.u32 %v664, 2146121005
        %v809 = vmul.u32 %v665, 2146121005
        %v810 = vmul.u32 %v666, 2146121005
        %v811 = vmul.u32 %v667, 2146121005
        %v812 = vmul.u32 %v668, 2146121005
        %v813 = vmul.u32 %v669, 2146121005
        %v814 = vmul.u32 %v670, 2146121005
        %v815 = vmul.u32 %v671, 2146121005
        %v816 = vmul.u32 %v672, 2146121005
        %v817 = vmul.u32 %v673, 2146121005
        %v818 = vmul.u32 %v674, 2146121005
        %v819 = vmul.u32 %v675, 2146121005
        %v820 = vmul.u32 %v676, 2146121005
        %v821 = vmul.u32 %v677, 2146121005
        %v822 = vmul.u32 %v678, 2146121005
        %v823 = vmul.u32 %v679, 2146121005
        %v824 = vmul.u32 %v680, 2146121005
        %v825 = vmul.u32 %v681, 2146121005
        %v826 = vmul.u32 %v682, 2146121005
        %v827 = vmul.u32 %v683, 2146121005
        %v828 = vmul.u32 %v684, 2146121005
        %v829 = vmul.u32 %v685, 2146121005
        %v830 = vmul.u32 %v686, 2146121005
        %v831 = vmul.u32 %v687, 2146121005
        %v832 = vmul.u32 %v688, 2146121005
        %v833 = vmul.u32 %v689, 2146121005
        %v834 = vmul.u32 %v690, 2146121005
        %v835 = vmul.u32 %v691, 2146121005
        %v836 = vmul.u32 %v692, 2146121005
        %v837 = vmul.u32 %v693, 2146121005
        %v838 = vmul.u32 %v694, 2146121005
        %v839 = vmul.u32 %v695, 2146121005
        %v840 = vmul.u32 %v696, 2146121005
        %v841 = vmul.u32 %v697, 2146121005
        %v842 = vmul.u32 %v698, 2146121005
        %v843 = vmul.u32 %v699, 2146121005
        %v844 = vmul.u32 %v700, 2146121005
        %v845 = vmul.u32 %v701, 2146121005
        %v846 = vmul.u32 %v702, 2146121005
        %v847 = vmul.u32 %v703, 2146121005
        %v848 = vmul.u32 %v704, 2146121005
        %v849 = vmul.u32 %v705, 2146121005
        %v850 = vmul.u32 %v706, 2146121005
        %v851 = vmul.u32 %v707, 2146121005
        %v852 = vmul.u32 %v708, 2146121005
        %v853 = vmul.u32 %v709, 2146121005
        %v854 = vmul.u32 %v710, 2146121005
        %v855 = vmul.u32 %v711, 2146121005
        %v856 = vmul.u32 %v712, 2146121005
        %v857 = vmul.u32 %v713, 2146121005
        %v858 = vmul.u32 %v714, 2146121005
        %v859 = vmul.u32 %v715, 2146121005
        %v860 = vmul.u32 %v716, 2146121005
        %v861 = vmul.u32 %v717, 2146121005
        %v862 = vmul.u32 %v718, 2146121005
        %v863 = vmul.u32 %v719, 2146121005
        %v864 = vmul.u32 %v720, 2146121005
        %v865 = vmul.u32 %v721, 2146121005
        %v866 = vmul.u32 %v722, 2146121005
        %v867 = vmul.u32 %v723, 2146121005
        %v868 = vmul.u32 %v724, 2146121005
        %v869 = vmul.u32 %v725, 2146121005
        %v870 = vmul.u32 %v726, 2146121005
        %v871 = vmul.u32 %v727, 2146121005
        %v872 = vmul.u32 %v728, 2146121005
        %v873 = vmul.u32 %v729, 2146121005
        %v874 = vmul.u32 %v730, 2146121005
        %v875 = vmul.u32 %v731, 2146121005
        %v876 = vmul.u32 %v732, 2146121005
        %v877 = vmul.u32 %v733, 2146121005
        %v878 = vmul.u32 %v734, 2146121005
        %v879 = vmul.u32 %v735, 2146121005
        %v880 = vmul.u32 %v736, 2146121005
        %v881 = vmul.u32 %v737, 2146121005
        %v882 = vmul.u32 %v738, 2146121005
        %v883 = vmul.u32 %v739, 2146121005
        %v884 = vmul.u32 %v740, 2146121005
        %v885 = vmul.u32 %v741, 2146121005
        %v886 = vmul.u32 %v742, 2146121005
        %v887 = vmul.u32 %v743, 2146121005
        %v888 = vmul.u32 %v744, 2146121005
        %v889 = vmul.u32 %v745, 2146121005
        %v890 = vmul.u32 %v746, 2146121005
        %v891 = vmul.u32 %v747, 2146121005
        %v892 = vmul.u32 %v748, 2146121005
        %v893 = vmul.u32 %v749, 2146121005
        %v894 = vmul.u32 %v750, 2146121005
        %v895 = vmul.u32 %v751, 2146121005
        %v896 = vmul.u32 %v752, 2146121005
        %v897 = vmul.u32 %v753, 2146121005
        %v898 = vmul.u32 %v754, 2146121005
        %v899 = vmul.u32 %v755, 2146121005
        %v900 = vmul.u32 %v756, 2146121005
        %v901 = vmul.u32 %v757, 2146121005
        %v902 = vmul.u32 %v758, 2146121005
        %v903 = vmul.u32 %v759, 2146121005
        %v904 = vmul.u32 %v760, 2146121005
        %v905 = vmul.u32 %v761, 2146121005
        %v906 = vmul.u32 %v762, 2146121005
        %v907 = vmul.u32 %v763, 2146121005
        %v908 = vmul.u32 %v764, 2146121005
        %v909 = vmul.u32 %v765, 2146121005
        %v910 = vmul.u32 %v766, 2146121005
        %v911 = vmul.u32 %v767, 2146121005
        %v912 = vmul.u32 %v768, 2146121005
        %v913 = vmul.u32 %v769, 2146121005
        %v914 = vmul.u32 %v770, 2146121005
        %v915 = vmul.u32 %v771, 2146121005
        %v916 = vmul.u32 %v772, 2146121005
        %v917 = vmul.u32 %v773, 2146121005
        %v918 = vmul.u32 %v774, 2146121005
        %v919 = vmul.u32 %v775, 2146121005
        %v920 = vmul.u32 %v776, 2146121005
        %v921 = vmul.u32 %v777, 2146121005
        %v922 = vmul.u32 %v778, 2146121005
        %v923 = vmul.u32 %v779, 2146121005
        %v924 = vmul.u32 %v780, 2146121005
        %v925 = vmul.u32 %v781, 2146121005
        %v926 = vmul.u32 %v782, 2146121005
        %v927 = vmul.u32 %v783, 2146121005
        %v928 = vmul.u32 %v784, 2146121005
        %v929 = vmul.u32 %v785, 2146121005
        %v930 = vmul.u32 %v786, 2146121005
        %v931 = vmul.u32 %v787, 2146121005
        %v932 = vmul.u32 %v788, 2146121005
        %v933 = vmul.u32 %v789, 2146121005
        %v934 = vmul.u32 %v790, 2146121005
        %v935 = vmul.u32 %v791, 2146121005
        %v936 = vmul.u32 %v792, 2146121005
        %v937 = vmul.u32 %v793, 2146121005
        %v938 = vmul.u32 %v794, 2146121005
        %v939 = vmul.u32 %v795, 2146121005
        %v940 = vmul.u32 %v796, 2146121005
        %v941 = vmul.u32 %v797, 2146121005
        %v942 = vmul.u32 %v798, 2146121005
        %v943 = vmul.u32 %v799, 2146121005
        %v944 = vmul.u32 %v800, 2146121005
        %v945 = vmul.u32 %v801, 2146121005
        %v946 = vmul.u32 %v802, 2146121005
        %v947 = vshrl.u32 %v803, 15
        %v948 = vshrl.u32 %v804, 15
        %v949 = vshrl.u32 %v805, 15
        %v950 = vshrl.u32 %v806, 15
        %v951 = vshrl.u32 %v807, 15
        %v952 = vshrl.u32 %v808, 15
        %v953 = vshrl.u32 %v809, 15
        %v954 = vshrl.u32 %v810, 15
        %v955 = vshrl.u32 %v811, 15
        %v956 = vshrl.u32 %v812, 15
        %v957 = vshrl.u32 %v813, 15
        %v958 = vshrl.u32 %v814, 15
        %v959 = vshrl.u32 %v815, 15
        %v960 = vshrl.u32 %v816, 15
        %v961 = vshrl.u32 %v817, 15
        %v962 = vshrl.u32 %v818, 15
        %v963 = vshrl.u32 %v819, 15
        %v964 = vshrl.u32 %v820, 15
        %v965 = vshrl.u32 %v821, 15
        %v966 = vshrl.u32 %v822, 15
        %v967 = vshrl.u32 %v823, 15
        %v968 = vshrl.u32 %v824, 15
        %v969 = vshrl.u32 %v825, 15
        %v970 = vshrl.u32 %v826, 15
        %v971 = vshrl.u32 %v827, 15
        %v972 = vshrl.u32 %v828, 15
        %v973 = vshrl.u32 %v829, 15
        %v974 = vshrl.u32 %v830, 15
        %v975 = vshrl.u32 %v831, 15
        %v976 = vshrl.u32 %v832, 15
        %v977 = vshrl.u32 %v833, 15
        %v978 = vshrl.u32 %v834, 15
        %v979 = vshrl.u32 %v835, 15
        %v980 = vshrl.u32 %v836, 15
        %v981 = vshrl.u32 %v837, 15
        %v982 = vshrl.u32 %v838, 15
        %v983 = vshrl.u32 %v839, 15
        %v984 = vshrl.u32 %v840, 15
        %v985 = vshrl.u32 %v841, 15
        %v986 = vshrl.u32 %v842, 15
        %v987 = vshrl.u32 %v843, 15
        %v988 = vshrl.u32 %v844, 15
        %v989 = vshrl.u32 %v845, 15
        %v990 = vshrl.u32 %v846, 15
        %v991 = vshrl.u32 %v847, 15
        %v992 = vshrl.u32 %v848, 15
        %v993 = vshrl.u32 %v849, 15
        %v994 = vshrl.u32 %v850, 15
        %v995 = vshrl.u32 %v851, 15
        %v996 = vshrl.u32 %v852, 15
        %v997 = vshrl.u32 %v853, 15
        %v998 = vshrl.u32 %v854, 15
        %v999 = vshrl.u32 %v855, 15
        %v1000 = vshrl.u32 %v856, 15
        %v1001 = vshrl.u32 %v857, 15
        %v1002 = vshrl.u32 %v858, 15
        %v1003 = vshrl.u32 %v859, 15
        %v1004 = vshrl.u32 %v860, 15
        %v1005 = vshrl.u32 %v861, 15
        %v1006 = vshrl.u32 %v862, 15
        %v1007 = vshrl.u32 %v863, 15
        %v1008 = vshrl.u32 %v864, 15
        %v1009 = vshrl.u32 %v865, 15
        %v1010 = vshrl.u32 %v866, 15
        %v1011 = vshrl.u32 %v867, 15
        %v1012 = vshrl.u32 %v868, 15
        %v1013 = vshrl.u32 %v869, 15
        %v1014 = vshrl.u32 %v870, 15
        %v1015 = vshrl.u32 %v871, 15
        %v1016 = vshrl.u32 %v872, 15
        %v1017 = vshrl.u32 %v873, 15
        %v1018 = vshrl.u32 %v874, 15
        %v1019 = vshrl.u32 %v875, 15
        %v1020 = vshrl.u32 %v876, 15
        %v1021 = vshrl.u32 %v877, 15
        %v1022 = vshrl.u32 %v878, 15
        %v1023 = vshrl.u32 %v879, 15
        %v1024 = vshrl.u32 %v880, 15
        %v1025 = vshrl.u32 %v881, 15
        %v1026 = vshrl.u32 %v882, 15
        %v1027 = vshrl.u32 %v883, 15
        %v1028 = vshrl.u32 %v884, 15
        %v1029 = vshrl.u32 %v885, 15
        %v1030 = vshrl.u32 %v886, 15
        %v1031 = vshrl.u32 %v887, 15
        %v1032 = vshrl.u32 %v888, 15
        %v1033 = vshrl.u32 %v889, 15
        %v1034 = vshrl.u32 %v890, 15
        %v1035 = vshrl.u32 %v891, 15
        %v1036 = vshrl.u32 %v892, 15
        %v1037 = vshrl.u32 %v893, 15
        %v1038 = vshrl.u32 %v894, 15
        %v1039 = vshrl.u32 %v895, 15
        %v1040 = vshrl.u32 %v896, 15
        %v1041 = vshrl.u32 %v897, 15
        %v1042 = vshrl.u32 %v898, 15
        %v1043 = vshrl.u32 %v899, 15
        %v1044 = vshrl.u32 %v900, 15
        %v1045 = vshrl.u32 %v901, 15
        %v1046 = vshrl.u32 %v902, 15
        %v1047 = vshrl.u32 %v903, 15
        %v1048 = vshrl.u32 %v904, 15
        %v1049 = vshrl.u32 %v905, 15
        %v1050 = vshrl.u32 %v906, 15
        %v1051 = vshrl.u32 %v907, 15
        %v1052 = vshrl.u32 %v908, 15
        %v1053 = vshrl.u32 %v909, 15
        %v1054 = vshrl.u32 %v910, 15
        %v1055 = vshrl.u32 %v911, 15
        %v1056 = vshrl.u32 %v912, 15
        %v1057 = vshrl.u32 %v913, 15
        %v1058 = vshrl.u32 %v914, 15
        %v1059 = vshrl.u32 %v915, 15
        %v1060 = vshrl.u32 %v916, 15
        %v1061 = vshrl.u32 %v917, 15
        %v1062 = vshrl.u32 %v918, 15
        %v1063 = vshrl.u32 %v919, 15
        %v1064 = vshrl.u32 %v920, 15
        %v1065 = vshrl.u32 %v921, 15
        %v1066 = vshrl.u32 %v922, 15
        %v1067 = vshrl.u32 %v923, 15
        %v1068 = vshrl.u32 %v924, 15
        %v1069 = vshrl.u32 %v925, 15
        %v1070 = vshrl.u32 %v926, 15
        %v1071 = vshrl.u32 %v927, 15
        %v1072 = vshrl.u32 %v928, 15
        %v1073 = vshrl.u32 %v929, 15
        %v1074 = vshrl.u32 %v930, 15
        %v1075 = vshrl.u32 %v931, 15
        %v1076 = vshrl.u32 %v932, 15
        %v1077 = vshrl.u32 %v933, 15
        %v1078 = vshrl.u32 %v934, 15
        %v1079 = vshrl.u32 %v935, 15
        %v1080 = vshrl.u32 %v936, 15
        %v1081 = vshrl.u32 %v937, 15
        %v1082 = vshrl.u32 %v938, 15
        %v1083 = vshrl.u32 %v939, 15
        %v1084 = vshrl.u32 %v940, 15
        %v1085 = vshrl.u32 %v941, 15
        %v1086 = vshrl.u32 %v942, 15
        %v1087 = vshrl.u32 %v943, 15
        %v1088 = vshrl.u32 %v944, 15
        %v1089 = vshrl.u32 %v945, 15
        %v1090 = vshrl.u32 %v946, 15
        %v1091 = vxor.u32 %v803, %v947
        %v1092 = vxor.u32 %v804, %v948
        %v1093 = vxor.u32 %v805, %v949
        %v1094 = vxor.u32 %v806, %v950
        %v1095 = vxor.u32 %v807, %v951
        %v1096 = vxor.u32 %v808, %v952
        %v1097 = vxor.u32 %v809, %v953
        %v1098 = vxor.u32 %v810, %v954
        %v1099 = vxor.u32 %v811, %v955
        %v1100 = vxor.u32 %v812, %v956
        %v1101 = vxor.u32 %v813, %v957
        %v1102 = vxor.u32 %v814, %v958
        %v1103 = vxor.u32 %v815, %v959
        %v1104 = vxor.u32 %v816, %v960
        %v1105 = vxor.u32 %v817, %v961
        %v1106 = vxor.u32 %v818, %v962
        %v1107 = vxor.u32 %v819, %v963
        %v1108 = vxor.u32 %v820, %v964
        %v1109 = vxor.u32 %v821, %v965
        %v1110 = vxor.u32 %v822, %v966
        %v1111 = vxor.u32 %v823, %v967
        %v1112 = vxor.u32 %v824, %v968
        %v1113 = vxor.u32 %v825, %v969
        %v1114 = vxor.u32 %v826, %v970
        %v1115 = vxor.u32 %v827, %v971
        %v1116 = vxor.u32 %v828, %v972
        %v1117 = vxor.u32 %v829, %v973
        %v1118 = vxor.u32 %v830, %v974
        %v1119 = vxor.u32 %v831, %v975
        %v1120 = vxor.u32 %v832, %v976
        %v1121 = vxor.u32 %v833, %v977
        %v1122 = vxor.u32 %v834, %v978
        %v1123 = vxor.u32 %v835, %v979
        %v1124 = vxor.u32 %v836, %v980
        %v1125 = vxor.u32 %v837, %v981
        %v1126 = vxor.u32 %v838, %v982
        %v1127 = vxor.u32 %v839, %v983
        %v1128 = vxor.u32 %v840, %v984
        %v1129 = vxor.u32 %v841, %v985
        %v1130 = vxor.u32 %v842, %v986
        %v1131 = vxor.u32 %v843, %v987
        %v1132 = vxor.u32 %v844, %v988
        %v1133 = vxor.u32 %v845, %v989
        %v1134 = vxor.u32 %v846, %v990
        %v1135 = vxor.u32 %v847, %v991
        %v1136 = vxor.u32 %v848, %v992
        %v1137 = vxor.u32 %v849, %v993
        %v1138 = vxor.u32 %v850, %v994
        %v1139 = vxor.u32 %v851, %v995
        %v1140 = vxor.u32 %v852, %v996
        %v1141 = vxor.u32 %v853, %v997
        %v1142 = vxor.u32 %v854, %v998
        %v1143 = vxor.u32 %v855, %v999
        %v1144 = vxor.u32 %v856, %v1000
        %v1145 = vxor.u32 %v857, %v1001
        %v1146 = vxor.u32 %v858, %v1002
        %v1147 = vxor.u32 %v859, %v1003
        %v1148 = vxor.u32 %v860, %v1004
        %v1149 = vxor.u32 %v861, %v1005
        %v1150 = vxor.u32 %v862, %v1006
        %v1151 = vxor.u32 %v863, %v1007
        %v1152 = vxor.u32 %v864, %v1008
        %v1153 = vxor.u32 %v865, %v1009
        %v1154 = vxor.u32 %v866, %v1010
        %v1155 = vxor.u32 %v867, %v1011
        %v1156 = vxor.u32 %v868, %v1012
        %v1157 = vxor.u32 %v869, %v1013
        %v1158 = vxor.u32 %v870, %v1014
        %v1159 = vxor.u32 %v871, %v1015
        %v1160 = vxor.u32 %v872, %v1016
        %v1161 = vxor.u32 %v873, %v1017
        %v1162 = vxor.u32 %v874, %v1018
        %v1163 = vxor.u32 %v875, %v1019
        %v1164 = vxor.u32 %v876, %v1020
        %v1165 = vxor.u32 %v877, %v1021
        %v1166 = vxor.u32 %v878, %v1022
        %v1167 = vxor.u32 %v879, %v1023
        %v1168 = vxor.u32 %v880, %v1024
        %v1169 = vxor.u32 %v881, %v1025
        %v1170 = vxor.u32 %v882, %v1026
        %v1171 = vxor.u32 %v883, %v1027
        %v1172 = vxor.u32 %v884, %v1028
        %v1173 = vxor.u32 %v885, %v1029
        %v1174 = vxor.u32 %v886, %v1030
        %v1175 = vxor.u32 %v887, %v1031
        %v1176 = vxor.u32 %v888, %v1032
        %v1177 = vxor.u32 %v889, %v1033
        %v1178 = vxor.u32 %v890, %v1034
        %v1179 = vxor.u32 %v891, %v1035
        %v1180 = vxor.u32 %v892, %v1036
        %v1181 = vxor.u32 %v893, %v1037
        %v1182 = vxor.u32 %v894, %v1038
        %v1183 = vxor.u32 %v895, %v1039
        %v1184 = vxor.u32 %v896, %v1040
        %v1185 = vxor.u32 %v897, %v1041
        %v1186 = vxor.u32 %v898, %v1042
        %v1187 = vxor.u32 %v899, %v1043
        %v1188 = vxor.u32 %v900, %v1044
        %v1189 = vxor.u32 %v901, %v1045
        %v1190 = vxor.u32 %v902, %v1046
        %v1191 = vxor.u32 %v903, %v1047
        %v1192 = vxor.u32 %v904, %v1048
        %v1193 = vxor.u32 %v905, %v1049
        %v1194 = vxor.u32 %v906, %v1050
        %v1195 = vxor.u32 %v907, %v1051
        %v1196 = vxor.u32 %v908, %v1052
        %v1197 = vxor.u32 %v909, %v1053
        %v1198 = vxor.u32 %v910, %v1054
        %v1199 = vxor.u32 %v911, %v1055
        %v1200 = vxor.u32 %v912, %v1056
        %v1201 = vxor.u32 %v913, %v1057
        %v1202 = vxor.u32 %v914, %v1058
        %v1203 = vxor.u32 %v915, %v1059
        %v1204 = vxor.u32 %v916, %v1060
        %v1205 = vxor.u32 %v917, %v1061
        %v1206 = vxor.u32 %v918, %v1062
        %v1207 = vxor.u32 %v919, %v1063
        %v1208 = vxor.u32 %v920, %v1064
        %v1209 = vxor.u32 %v921, %v1065
        %v1210 = vxor.u32 %v922, %v1066
        %v1211 = vxor.u32 %v923, %v1067
        %v1212 = vxor.u32 %v924, %v1068
        %v1213 = vxor.u32 %v925, %v1069
        %v1214 = vxor.u32 %v926, %v1070
        %v1215 = vxor.u32 %v927, %v1071
        %v1216 = vxor.u32 %v928, %v1072
        %v1217 = vxor.u32 %v929, %v1073
        %v1218 = vxor.u32 %v930, %v1074
        %v1219 = vxor.u32 %v931, %v1075
        %v1220 = vxor.u32 %v932, %v1076
        %v1221 = vxor.u32 %v933, %v1077
        %v1222 = vxor.u32 %v934, %v1078
        %v1223 = vxor.u32 %v935, %v1079
        %v1224 = vxor.u32 %v936, %v1080
        %v1225 = vxor.u32 %v937, %v1081
        %v1226 = vxor.u32 %v938, %v1082
        %v1227 = vxor.u32 %v939, %v1083
        %v1228 = vxor.u32 %v940, %v1084
        %v1229 = vxor.u32 %v941, %v1085
        %v1230 = vxor.u32 %v942, %v1086
        %v1231 = vxor.u32 %v943, %v1087
        %v1232 = vxor.u32 %v944, %v1088
        %v1233 = vxor.u32 %v945, %v1089
        %v1234 = vxor.u32 %v946, %v1090
        %v1235 = vmul.u32 %v1091, 2221713035
        %v1236 = vmul.u32 %v1092, 2221713035
        %v1237 = vmul.u32 %v1093, 2221713035
        %v1238 = vmul.u32 %v1094, 2221713035
        %v1239 = vmul.u32 %v1095, 2221713035
        %v1240 = vmul.u32 %v1096, 2221713035
        %v1241 = vmul.u32 %v1097, 2221713035
        %v1242 = vmul.u32 %v1098, 2221713035
        %v1243 = vmul.u32 %v1099, 2221713035
        %v1244 = vmul.u32 %v1100, 2221713035
        %v1245 = vmul.u32 %v1101, 2221713035
        %v1246 = vmul.u32 %v1102, 2221713035
        %v1247 = vmul.u32 %v1103, 2221713035
        %v1248 = vmul.u32 %v1104, 2221713035
        %v1249 = vmul.u32 %v1105, 2221713035
        %v1250 = vmul.u32 %v1106, 2221713035
        %v1251 = vmul.u32 %v1107, 2221713035
        %v1252 = vmul.u32 %v1108, 2221713035
        %v1253 = vmul.u32 %v1109, 2221713035
        %v1254 = vmul.u32 %v1110, 2221713035
        %v1255 = vmul.u32 %v1111, 2221713035
        %v1256 = vmul.u32 %v1112, 2221713035
        %v1257 = vmul.u32 %v1113, 2221713035
        %v1258 = vmul.u32 %v1114, 2221713035
        %v1259 = vmul.u32 %v1115, 2221713035
        %v1260 = vmul.u32 %v1116, 2221713035
        %v1261 = vmul.u32 %v1117, 2221713035
        %v1262 = vmul.u32 %v1118, 2221713035
        %v1263 = vmul.u32 %v1119, 2221713035
        %v1264 = vmul.u32 %v1120, 2221713035
        %v1265 = vmul.u32 %v1121, 2221713035
        %v1266 = vmul.u32 %v1122, 2221713035
        %v1267 = vmul.u32 %v1123, 2221713035
        %v1268 = vmul.u32 %v1124, 2221713035
        %v1269 = vmul.u32 %v1125, 2221713035
        %v1270 = vmul.u32 %v1126, 2221713035
        %v1271 = vmul.u32 %v1127, 2221713035
        %v1272 = vmul.u32 %v1128, 2221713035
        %v1273 = vmul.u32 %v1129, 2221713035
        %v1274 = vmul.u32 %v1130, 2221713035
        %v1275 = vmul.u32 %v1131, 2221713035
        %v1276 = vmul.u32 %v1132, 2221713035
        %v1277 = vmul.u32 %v1133, 2221713035
        %v1278 = vmul.u32 %v1134, 2221713035
        %v1279 = vmul.u32 %v1135, 2221713035
        %v1280 = vmul.u32 %v1136, 2221713035
        %v1281 = vmul.u32 %v1137, 2221713035
        %v1282 = vmul.u32 %v1138, 2221713035
        %v1283 = vmul.u32 %v1139, 2221713035
        %v1284 = vmul.u32 %v1140, 2221713035
        %v1285 = vmul.u32 %v1141, 2221713035
        %v1286 = vmul.u32 %v1142, 2221713035
        %v1287 = vmul.u32 %v1143, 2221713035
        %v1288 = vmul.u32 %v1144, 2221713035
        %v1289 = vmul.u32 %v1145, 2221713035
        %v1290 = vmul.u32 %v1146, 2221713035
        %v1291 = vmul.u32 %v1147, 2221713035
        %v1292 = vmul.u32 %v1148, 2221713035
        %v1293 = vmul.u32 %v1149, 2221713035
        %v1294 = vmul.u32 %v1150, 2221713035
        %v1295 = vmul.u32 %v1151, 2221713035
        %v1296 = vmul.u32 %v1152, 2221713035
        %v1297 = vmul.u32 %v1153, 2221713035
        %v1298 = vmul.u32 %v1154, 2221713035
        %v1299 = vmul.u32 %v1155, 2221713035
        %v1300 = vmul.u32 %v1156, 2221713035
        %v1301 = vmul.u32 %v1157, 2221713035
        %v1302 = vmul.u32 %v1158, 2221713035
        %v1303 = vmul.u32 %v1159, 2221713035
        %v1304 = vmul.u32 %v1160, 2221713035
        %v1305 = vmul.u32 %v1161, 2221713035
        %v1306 = vmul.u32 %v1162, 2221713035
        %v1307 = vmul.u32 %v1163, 2221713035
        %v1308 = vmul.u32 %v1164, 2221713035
        %v1309 = vmul.u32 %v1165, 2221713035
        %v1310 = vmul.u32 %v1166, 2221713035
        %v1311 = vmul.u32 %v1167, 2221713035
        %v1312 = vmul.u32 %v1168, 2221713035
        %v1313 = vmul.u32 %v1169, 2221713035
        %v1314 = vmul.u32 %v1170, 2221713035
        %v1315 = vmul.u32 %v1171, 2221713035
        %v1316 = vmul.u32 %v1172, 2221713035
        %v1317 = vmul.u32 %v1173, 2221713035
        %v1318 = vmul.u32 %v1174, 2221713035
        %v1319 = vmul.u32 %v1175, 2221713035
        %v1320 = vmul.u32 %v1176, 2221713035
        %v1321 = vmul.u32 %v1177, 2221713035
        %v1322 = vmul.u32 %v1178, 2221713035
        %v1323 = vmul.u32 %v1179, 2221713035
        %v1324 = vmul.u32 %v1180, 2221713035
        %v1325 = vmul.u32 %v1181, 2221713035
        %v1326 = vmul.u32 %v1182, 2221713035
        %v1327 = vmul.u32 %v1183, 2221713035
        %v1328 = vmul.u32 %v1184, 2221713035
        %v1329 = vmul.u32 %v1185, 2221713035
        %v1330 = vmul.u32 %v1186, 2221713035
        %v1331 = vmul.u32 %v1187, 2221713035
        %v1332 = vmul.u32 %v1188, 2221713035
        %v1333 = vmul.u32 %v1189, 2221713035
        %v1334 = vmul.u32 %v1190, 2221713035
        %v1335 = vmul.u32 %v1191, 2221713035
        %v1336 = vmul.u32 %v1192, 2221713035
        %v1337 = vmul.u32 %v1193, 2221713035
        %v1338 = vmul.u32 %v1194, 2221713035
        %v1339 = vmul.u32 %v1195, 2221713035
        %v1340 = vmul.u32 %v1196, 2221713035
        %v1341 = vmul.u32 %v1197, 2221713035
        %v1342 = vmul.u32 %v1198, 2221713035
        %v1343 = vmul.u32 %v1199, 2221713035
        %v1344 = vmul.u32 %v1200, 2221713035
        %v1345 = vmul.u32 %v1201, 2221713035
        %v1346 = vmul.u32 %v1202, 2221713035
        %v1347 = vmul.u32 %v1203, 2221713035
        %v1348 = vmul.u32 %v1204, 2221713035
        %v1349 = vmul.u32 %v1205, 2221713035
        %v1350 = vmul.u32 %v1206, 2221713035
        %v1351 = vmul.u32 %v1207, 2221713035
        %v1352 = vmul.u32 %v1208, 2221713035
        %v1353 = vmul.u32 %v1209, 2221713035
        %v1354 = vmul.u32 %v1210, 2221713035
        %v1355 = vmul.u32 %v1211, 2221713035
        %v1356 = vmul.u32 %v1212, 2221713035
        %v1357 = vmul.u32 %v1213, 2221713035
        %v1358 = vmul.u32 %v1214, 2221713035
        %v1359 = vmul.u32 %v1215, 2221713035
        %v1360 = vmul.u32 %v1216, 2221713035
        %v1361 = vmul.u32 %v1217, 2221713035
        %v1362 = vmul.u32 %v1218, 2221713035
        %v1363 = vmul.u32 %v1219, 2221713035
        %v1364 = vmul.u32 %v1220, 2221713035
        %v1365 = vmul.u32 %v1221, 2221713035
        %v1366 = vmul.u32 %v1222, 2221713035
        %v1367 = vmul.u32 %v1223, 2221713035
        %v1368 = vmul.u32 %v1224, 2221713035
        %v1369 = vmul.u32 %v1225, 2221713035
        %v1370 = vmul.u32 %v1226, 2221713035
        %v1371 = vmul.u32 %v1227, 2221713035
        %v1372 = vmul.u32 %v1228, 2221713035
        %v1373 = vmul.u32 %v1229, 2221713035
        %v1374 = vmul.u32 %v1230, 2221713035
        %v1375 = vmul.u32 %v1231, 2221713035
        %v1376 = vmul.u32 %v1232, 2221713035
        %v1377 = vmul.u32 %v1233, 2221713035
        %v1378 = vmul.u32 %v1234, 2221713035
        %v1379 = vshrl.u32 %v1235, 16
        %v1380 = vshrl.u32 %v1236, 16
        %v1381 = vshrl.u32 %v1237, 16
        %v1382 = vshrl.u32 %v1238, 16
        %v1383 = vshrl.u32 %v1239, 16
        %v1384 = vshrl.u32 %v1240, 16
        %v1385 = vshrl.u32 %v1241, 16
        %v1386 = vshrl.u32 %v1242, 16
        %v1387 = vshrl.u32 %v1243, 16
        %v1388 = vshrl.u32 %v1244, 16
        %v1389 = vshrl.u32 %v1245, 16
        %v1390 = vshrl.u32 %v1246, 16
        %v1391 = vshrl.u32 %v1247, 16
        %v1392 = vshrl.u32 %v1248, 16
        %v1393 = vshrl.u32 %v1249, 16
        %v1394 = vshrl.u32 %v1250, 16
        %v1395 = vshrl.u32 %v1251, 16
        %v1396 = vshrl.u32 %v1252, 16
        %v1397 = vshrl.u32 %v1253, 16
        %v1398 = vshrl.u32 %v1254, 16
        %v1399 = vshrl.u32 %v1255, 16
        %v1400 = vshrl.u32 %v1256, 16
        %v1401 = vshrl.u32 %v1257, 16
        %v1402 = vshrl.u32 %v1258, 16
        %v1403 = vshrl.u32 %v1259, 16
        %v1404 = vshrl.u32 %v1260, 16
        %v1405 = vshrl.u32 %v1261, 16
        %v1406 = vshrl.u32 %v1262, 16
        %v1407 = vshrl.u32 %v1263, 16
        %v1408 = vshrl.u32 %v1264, 16
        %v1409 = vshrl.u32 %v1265, 16
        %v1410 = vshrl.u32 %v1266, 16
        %v1411 = vshrl.u32 %v1267, 16
        %v1412 = vshrl.u32 %v1268, 16
        %v1413 = vshrl.u32 %v1269, 16
        %v1414 = vshrl.u32 %v1270, 16
        %v1415 = vshrl.u32 %v1271, 16
        %v1416 = vshrl.u32 %v1272, 16
        %v1417 = vshrl.u32 %v1273, 16
        %v1418 = vshrl.u32 %v1274, 16
        %v1419 = vshrl.u32 %v1275, 16
        %v1420 = vshrl.u32 %v1276, 16
        %v1421 = vshrl.u32 %v1277, 16
        %v1422 = vshrl.u32 %v1278, 16
        %v1423 = vshrl.u32 %v1279, 16
        %v1424 = vshrl.u32 %v1280, 16
        %v1425 = vshrl.u32 %v1281, 16
        %v1426 = vshrl.u32 %v1282, 16
        %v1427 = vshrl.u32 %v1283, 16
        %v1428 = vshrl.u32 %v1284, 16
        %v1429 = vshrl.u32 %v1285, 16
        %v1430 = vshrl.u32 %v1286, 16
        %v1431 = vshrl.u32 %v1287, 16
        %v1432 = vshrl.u32 %v1288, 16
        %v1433 = vshrl.u32 %v1289, 16
        %v1434 = vshrl.u32 %v1290, 16
        %v1435 = vshrl.u32 %v1291, 16
        %v1436 = vshrl.u32 %v1292, 16
        %v1437 = vshrl.u32 %v1293, 16
        %v1438 = vshrl.u32 %v1294, 16
        %v1439 = vshrl.u32 %v1295, 16
        %v1440 = vshrl.u32 %v1296, 16
        %v1441 = vshrl.u32 %v1297, 16
        %v1442 = vshrl.u32 %v1298, 16
        %v1443 = vshrl.u32 %v1299, 16
        %v1444 = vshrl.u32 %v1300, 16
        %v1445 = vshrl.u32 %v1301, 16
        %v1446 = vshrl.u32 %v1302, 16
        %v1447 = vshrl.u32 %v1303, 16
        %v1448 = vshrl.u32 %v1304, 16
        %v1449 = vshrl.u32 %v1305, 16
        %v1450 = vshrl.u32 %v1306, 16
        %v1451 = vshrl.u32 %v1307, 16
        %v1452 = vshrl.u32 %v1308, 16
        %v1453 = vshrl.u32 %v1309, 16
        %v1454 = vshrl.u32 %v1310, 16
        %v1455 = vshrl.u32 %v1311, 16
        %v1456 = vshrl.u32 %v1312, 16
        %v1457 = vshrl.u32 %v1313, 16
        %v1458 = vshrl.u32 %v1314, 16
        %v1459 = vshrl.u32 %v1315, 16
        %v1460 = vshrl.u32 %v1316, 16
        %v1461 = vshrl.u32 %v1317, 16
        %v1462 = vshrl.u32 %v1318, 16
        %v1463 = vshrl.u32 %v1319, 16
        %v1464 = vshrl.u32 %v1320, 16
        %v1465 = vshrl.u32 %v1321, 16
        %v1466 = vshrl.u32 %v1322, 16
        %v1467 = vshrl.u32 %v1323, 16
        %v1468 = vshrl.u32 %v1324, 16
        %v1469 = vshrl.u32 %v1325, 16
        %v1470 = vshrl.u32 %v1326, 16
        %v1471 = vshrl.u32 %v1327, 16
        %v1472 = vshrl.u32 %v1328, 16
        %v1473 = vshrl.u32 %v1329, 16
        %v1474 = vshrl.u32 %v1330, 16
        %v1475 = vshrl.u32 %v1331, 16
        %v1476 = vshrl.u32 %v1332, 16
        %v1477 = vshrl.u32 %v1333, 16
        %v1478 = vshrl.u32 %v1334, 16
        %v1479 = vshrl.u32 %v1335, 16
        %v1480 = vshrl.u32 %v1336, 16
        %v1481 = vshrl.u32 %v1337, 16
        %v1482 = vshrl.u32 %v1338, 16
        %v1483 = vshrl.u32 %v1339, 16
        %v1484 = vshrl.u32 %v1340, 16
        %v1485 = vshrl.u32 %v1341, 16
        %v1486 = vshrl.u32 %v1342, 16
        %v1487 = vshrl.u32 %v1343, 16
        %v1488 = vshrl.u32 %v1344, 16
        %v1489 = vshrl.u32 %v1345, 16
        %v1490 = vshrl.u32 %v1346, 16
        %v1491 = vshrl.u32 %v1347, 16
        %v1492 = vshrl.u32 %v1348, 16
        %v1493 = vshrl.u32 %v1349, 16
        %v1494 = vshrl.u32 %v1350, 16
        %v1495 = vshrl.u32 %v1351, 16
        %v1496 = vshrl.u32 %v1352, 16
        %v1497 = vshrl.u32 %v1353, 16
        %v1498 = vshrl.u32 %v1354, 16
        %v1499 = vshrl.u32 %v1355, 16
        %v1500 = vshrl.u32 %v1356, 16
        %v1501 = vshrl.u32 %v1357, 16
        %v1502 = vshrl.u32 %v1358, 16
        %v1503 = vshrl.u32 %v1359, 16
        %v1504 = vshrl.u32 %v1360, 16
        %v1505 = vshrl.u32 %v1361, 16
        %v1506 = vshrl.u32 %v1362, 16
        %v1507 = vshrl.u32 %v1363, 16
        %v1508 = vshrl.u32 %v1364, 16
        %v1509 = vshrl.u32 %v1365, 16
        %v1510 = vshrl.u32 %v1366, 16
        %v1511 = vshrl.u32 %v1367, 16
        %v1512 = vshrl.u32 %v1368, 16
        %v1513 = vshrl.u32 %v1369, 16
        %v1514 = vshrl.u32 %v1370, 16
        %v1515 = vshrl.u32 %v1371, 16
        %v1516 = vshrl.u32 %v1372, 16
        %v1517 = vshrl.u32 %v1373, 16
        %v1518 = vshrl.u32 %v1374, 16
        %v1519 = vshrl.u32 %v1375, 16
        %v1520 = vshrl.u32 %v1376, 16
        %v1521 = vshrl.u32 %v1377, 16
        %v1522 = vshrl.u32 %v1378, 16
        %v1523 = vxor.u32 %v1235, %v1379
        %v1524 = vxor.u32 %v1236, %v1380
        %v1525 = vxor.u32 %v1237, %v1381
        %v1526 = vxor.u32 %v1238, %v1382
        %v1527 = vxor.u32 %v1239, %v1383
        %v1528 = vxor.u32 %v1240, %v1384
        %v1529 = vxor.u32 %v1241, %v1385
        %v1530 = vxor.u32 %v1242, %v1386
        %v1531 = vxor.u32 %v1243, %v1387
        %v1532 = vxor.u32 %v1244, %v1388
        %v1533 = vxor.u32 %v1245, %v1389
        %v1534 = vxor.u32 %v1246, %v1390
        %v1535 = vxor.u32 %v1247, %v1391
        %v1536 = vxor.u32 %v1248, %v1392
        %v1537 = vxor.u32 %v1249, %v1393
        %v1538 = vxor.u32 %v1250, %v1394
        %v1539 = vxor.u32 %v1251, %v1395
        %v1540 = vxor.u32 %v1252, %v1396
        %v1541 = vxor.u32 %v1253, %v1397
        %v1542 = vxor.u32 %v1254, %v1398
        %v1543 = vxor.u32 %v1255, %v1399
        %v1544 = vxor.u32 %v1256, %v1400
        %v1545 = vxor.u32 %v1257, %v1401
        %v1546 = vxor.u32 %v1258, %v1402
        %v1547 = vxor.u32 %v1259, %v1403
        %v1548 = vxor.u32 %v1260, %v1404
        %v1549 = vxor.u32 %v1261, %v1405
        %v1550 = vxor.u32 %v1262, %v1406
        %v1551 = vxor.u32 %v1263, %v1407
        %v1552 = vxor.u32 %v1264, %v1408
        %v1553 = vxor.u32 %v1265, %v1409
        %v1554 = vxor.u32 %v1266, %v1410
        %v1555 = vxor.u32 %v1267, %v1411
        %v1556 = vxor.u32 %v1268, %v1412
        %v1557 = vxor.u32 %v1269, %v1413
        %v1558 = vxor.u32 %v1270, %v1414
        %v1559 = vxor.u32 %v1271, %v1415
        %v1560 = vxor.u32 %v1272, %v1416
        %v1561 = vxor.u32 %v1273, %v1417
        %v1562 = vxor.u32 %v1274, %v1418
        %v1563 = vxor.u32 %v1275, %v1419
        %v1564 = vxor.u32 %v1276, %v1420
        %v1565 = vxor.u32 %v1277, %v1421
        %v1566 = vxor.u32 %v1278, %v1422
        %v1567 = vxor.u32 %v1279, %v1423
        %v1568 = vxor.u32 %v1280, %v1424
        %v1569 = vxor.u32 %v1281, %v1425
        %v1570 = vxor.u32 %v1282, %v1426
        %v1571 = vxor.u32 %v1283, %v1427
        %v1572 = vxor.u32 %v1284, %v1428
        %v1573 = vxor.u32 %v1285, %v1429
        %v1574 = vxor.u32 %v1286, %v1430
        %v1575 = vxor.u32 %v1287, %v1431
        %v1576 = vxor.u32 %v1288, %v1432
        %v1577 = vxor.u32 %v1289, %v1433
        %v1578 = vxor.u32 %v1290, %v1434
        %v1579 = vxor.u32 %v1291, %v1435
        %v1580 = vxor.u32 %v1292, %v1436
        %v1581 = vxor.u32 %v1293, %v1437
        %v1582 = vxor.u32 %v1294, %v1438
        %v1583 = vxor.u32 %v1295, %v1439
        %v1584 = vxor.u32 %v1296, %v1440
        %v1585 = vxor.u32 %v1297, %v1441
        %v1586 = vxor.u32 %v1298, %v1442
        %v1587 = vxor.u32 %v1299, %v1443
        %v1588 = vxor.u32 %v1300, %v1444
        %v1589 = vxor.u32 %v1301, %v1445
        %v1590 = vxor.u32 %v1302, %v1446
        %v1591 = vxor.u32 %v1303, %v1447
        %v1592 = vxor.u32 %v1304, %v1448
        %v1593 = vxor.u32 %v1305, %v1449
        %v1594 = vxor.u32 %v1306, %v1450
        %v1595 = vxor.u32 %v1307, %v1451
        %v1596 = vxor.u32 %v1308, %v1452
        %v1597 = vxor.u32 %v1309, %v1453
        %v1598 = vxor.u32 %v1310, %v1454
        %v1599 = vxor.u32 %v1311, %v1455
        %v1600 = vxor.u32 %v1312, %v1456
        %v1601 = vxor.u32 %v1313, %v1457
        %v1602 = vxor.u32 %v1314, %v1458
        %v1603 = vxor.u32 %v1315, %v1459
        %v1604 = vxor.u32 %v1316, %v1460
        %v1605 = vxor.u32 %v1317, %v1461
        %v1606 = vxor.u32 %v1318, %v1462
        %v1607 = vxor.u32 %v1319, %v1463
        %v1608 = vxor.u32 %v1320, %v1464
        %v1609 = vxor.u32 %v1321, %v1465
        %v1610 = vxor.u32 %v1322, %v1466
        %v1611 = vxor.u32 %v1323, %v1467
        %v1612 = vxor.u32 %v1324, %v1468
        %v1613 = vxor.u32 %v1325, %v1469
        %v1614 = vxor.u32 %v1326, %v1470
        %v1615 = vxor.u32 %v1327, %v1471
        %v1616 = vxor.u32 %v1328, %v1472
        %v1617 = vxor.u32 %v1329, %v1473
        %v1618 = vxor.u32 %v1330, %v1474
        %v1619 = vxor.u32 %v1331, %v1475
        %v1620 = vxor.u32 %v1332, %v1476
        %v1621 = vxor.u32 %v1333, %v1477
        %v1622 = vxor.u32 %v1334, %v1478
        %v1623 = vxor.u32 %v1335, %v1479
        %v1624 = vxor.u32 %v1336, %v1480
        %v1625 = vxor.u32 %v1337, %v1481
        %v1626 = vxor.u32 %v1338, %v1482
        %v1627 = vxor.u32 %v1339, %v1483
        %v1628 = vxor.u32 %v1340, %v1484
        %v1629 = vxor.u32 %v1341, %v1485
        %v1630 = vxor.u32 %v1342, %v1486
        %v1631 = vxor.u32 %v1343, %v1487
        %v1632 = vxor.u32 %v1344, %v1488
        %v1633 = vxor.u32 %v1345, %v1489
        %v1634 = vxor.u32 %v1346, %v1490
        %v1635 = vxor.u32 %v1347, %v1491
        %v1636 = vxor.u32 %v1348, %v1492
        %v1637 = vxor.u32 %v1349, %v1493
        %v1638 = vxor.u32 %v1350, %v1494
        %v1639 = vxor.u32 %v1351, %v1495
        %v1640 = vxor.u32 %v1352, %v1496
        %v1641 = vxor.u32 %v1353, %v1497
        %v1642 = vxor.u32 %v1354, %v1498
        %v1643 = vxor.u32 %v1355, %v1499
        %v1644 = vxor.u32 %v1356, %v1500
        %v1645 = vxor.u32 %v1357, %v1501
        %v1646 = vxor.u32 %v1358, %v1502
        %v1647 = vxor.u32 %v1359, %v1503
        %v1648 = vxor.u32 %v1360, %v1504
        %v1649 = vxor.u32 %v1361, %v1505
        %v1650 = vxor.u32 %v1362, %v1506
        %v1651 = vxor.u32 %v1363, %v1507
        %v1652 = vxor.u32 %v1364, %v1508
        %v1653 = vxor.u32 %v1365, %v1509
        %v1654 = vxor.u32 %v1366, %v1510
        %v1655 = vxor.u32 %v1367, %v1511
        %v1656 = vxor.u32 %v1368, %v1512
        %v1657 = vxor.u32 %v1369, %v1513
        %v1658 = vxor.u32 %v1370, %v1514
        %v1659 = vxor.u32 %v1371, %v1515
        %v1660 = vxor.u32 %v1372, %v1516
        %v1661 = vxor.u32 %v1373, %v1517
        %v1662 = vxor.u32 %v1374, %v1518
        %v1663 = vxor.u32 %v1375, %v1519
        %v1664 = vxor.u32 %v1376, %v1520
        %v1665 = vxor.u32 %v1377, %v1521
        %v1666 = vxor.u32 %v1378, %v1522
        %v1667 = vadd.s32 %v1523, 2147483648
        %vm1669 = vcmp.ge.s32.totalorder %v1667, 2576980377
        %v1670 = vadd.s32 %v1524, 2147483648
        %vm1672 = vcmp.ge.s32.totalorder %v1670, 2576980377
        %v1673 = vadd.s32 %v1525, 2147483648
        %vm1675 = vcmp.ge.s32.totalorder %v1673, 2576980377
        %v1676 = vadd.s32 %v1526, 2147483648
        %vm1678 = vcmp.ge.s32.totalorder %v1676, 2576980377
        %v1679 = vadd.s32 %v1527, 2147483648
        %vm1681 = vcmp.ge.s32.totalorder %v1679, 2576980377
        %v1682 = vadd.s32 %v1528, 2147483648
        %vm1684 = vcmp.ge.s32.totalorder %v1682, 2576980377
        %v1685 = vadd.s32 %v1529, 2147483648
        %vm1687 = vcmp.ge.s32.totalorder %v1685, 2576980377
        %v1688 = vadd.s32 %v1530, 2147483648
        %vm1690 = vcmp.ge.s32.totalorder %v1688, 2576980377
        %v1691 = vadd.s32 %v1531, 2147483648
        %vm1693 = vcmp.ge.s32.totalorder %v1691, 2576980377
        %v1694 = vadd.s32 %v1532, 2147483648
        %vm1696 = vcmp.ge.s32.totalorder %v1694, 2576980377
        %v1697 = vadd.s32 %v1533, 2147483648
        %vm1699 = vcmp.ge.s32.totalorder %v1697, 2576980377
        %v1700 = vadd.s32 %v1534, 2147483648
        %vm1702 = vcmp.ge.s32.totalorder %v1700, 2576980377
        %v1703 = vadd.s32 %v1535, 2147483648
        %vm1705 = vcmp.ge.s32.totalorder %v1703, 2576980377
        %v1706 = vadd.s32 %v1536, 2147483648
        %vm1708 = vcmp.ge.s32.totalorder %v1706, 2576980377
        %v1709 = vadd.s32 %v1537, 2147483648
        %vm1711 = vcmp.ge.s32.totalorder %v1709, 2576980377
        %v1712 = vadd.s32 %v1538, 2147483648
        %vm1714 = vcmp.ge.s32.totalorder %v1712, 2576980377
        %v1715 = vadd.s32 %v1539, 2147483648
        %vm1717 = vcmp.ge.s32.totalorder %v1715, 2576980377
        %v1718 = vadd.s32 %v1540, 2147483648
        %vm1720 = vcmp.ge.s32.totalorder %v1718, 2576980377
        %v1721 = vadd.s32 %v1541, 2147483648
        %vm1723 = vcmp.ge.s32.totalorder %v1721, 2576980377
        %v1724 = vadd.s32 %v1542, 2147483648
        %vm1726 = vcmp.ge.s32.totalorder %v1724, 2576980377
        %v1727 = vadd.s32 %v1543, 2147483648
        %vm1729 = vcmp.ge.s32.totalorder %v1727, 2576980377
        %v1730 = vadd.s32 %v1544, 2147483648
        %vm1732 = vcmp.ge.s32.totalorder %v1730, 2576980377
        %v1733 = vadd.s32 %v1545, 2147483648
        %vm1735 = vcmp.ge.s32.totalorder %v1733, 2576980377
        %v1736 = vadd.s32 %v1546, 2147483648
        %vm1738 = vcmp.ge.s32.totalorder %v1736, 2576980377
        %v1739 = vadd.s32 %v1547, 2147483648
        %vm1741 = vcmp.ge.s32.totalorder %v1739, 2576980377
        %v1742 = vadd.s32 %v1548, 2147483648
        %vm1744 = vcmp.ge.s32.totalorder %v1742, 2576980377
        %v1745 = vadd.s32 %v1549, 2147483648
        %vm1747 = vcmp.ge.s32.totalorder %v1745, 2576980377
        %v1748 = vadd.s32 %v1550, 2147483648
        %vm1750 = vcmp.ge.s32.totalorder %v1748, 2576980377
        %v1751 = vadd.s32 %v1551, 2147483648
        %vm1753 = vcmp.ge.s32.totalorder %v1751, 2576980377
        %v1754 = vadd.s32 %v1552, 2147483648
        %vm1756 = vcmp.ge.s32.totalorder %v1754, 2576980377
        %v1757 = vadd.s32 %v1553, 2147483648
        %vm1759 = vcmp.ge.s32.totalorder %v1757, 2576980377
        %v1760 = vadd.s32 %v1554, 2147483648
        %vm1762 = vcmp.ge.s32.totalorder %v1760, 2576980377
        %v1763 = vadd.s32 %v1555, 2147483648
        %vm1765 = vcmp.ge.s32.totalorder %v1763, 2576980377
        %v1766 = vadd.s32 %v1556, 2147483648
        %vm1768 = vcmp.ge.s32.totalorder %v1766, 2576980377
        %v1769 = vadd.s32 %v1557, 2147483648
        %vm1771 = vcmp.ge.s32.totalorder %v1769, 2576980377
        %v1772 = vadd.s32 %v1558, 2147483648
        %vm1774 = vcmp.ge.s32.totalorder %v1772, 2576980377
        %v1775 = vadd.s32 %v1559, 2147483648
        %vm1777 = vcmp.ge.s32.totalorder %v1775, 2576980377
        %v1778 = vadd.s32 %v1560, 2147483648
        %vm1780 = vcmp.ge.s32.totalorder %v1778, 2576980377
        %v1781 = vadd.s32 %v1561, 2147483648
        %vm1783 = vcmp.ge.s32.totalorder %v1781, 2576980377
        %v1784 = vadd.s32 %v1562, 2147483648
        %vm1786 = vcmp.ge.s32.totalorder %v1784, 2576980377
        %v1787 = vadd.s32 %v1563, 2147483648
        %vm1789 = vcmp.ge.s32.totalorder %v1787, 2576980377
        %v1790 = vadd.s32 %v1564, 2147483648
        %vm1792 = vcmp.ge.s32.totalorder %v1790, 2576980377
        %v1793 = vadd.s32 %v1565, 2147483648
        %vm1795 = vcmp.ge.s32.totalorder %v1793, 2576980377
        %v1796 = vadd.s32 %v1566, 2147483648
        %vm1798 = vcmp.ge.s32.totalorder %v1796, 2576980377
        %v1799 = vadd.s32 %v1567, 2147483648
        %vm1801 = vcmp.ge.s32.totalorder %v1799, 2576980377
        %v1802 = vadd.s32 %v1568, 2147483648
        %vm1804 = vcmp.ge.s32.totalorder %v1802, 2576980377
        %v1805 = vadd.s32 %v1569, 2147483648
        %vm1807 = vcmp.ge.s32.totalorder %v1805, 2576980377
        %v1808 = vadd.s32 %v1570, 2147483648
        %vm1810 = vcmp.ge.s32.totalorder %v1808, 2576980377
        %v1811 = vadd.s32 %v1571, 2147483648
        %vm1813 = vcmp.ge.s32.totalorder %v1811, 2576980377
        %v1814 = vadd.s32 %v1572, 2147483648
        %vm1816 = vcmp.ge.s32.totalorder %v1814, 2576980377
        %v1817 = vadd.s32 %v1573, 2147483648
        %vm1819 = vcmp.ge.s32.totalorder %v1817, 2576980377
        %v1820 = vadd.s32 %v1574, 2147483648
        %vm1822 = vcmp.ge.s32.totalorder %v1820, 2576980377
        %v1823 = vadd.s32 %v1575, 2147483648
        %vm1825 = vcmp.ge.s32.totalorder %v1823, 2576980377
        %v1826 = vadd.s32 %v1576, 2147483648
        %vm1828 = vcmp.ge.s32.totalorder %v1826, 2576980377
        %v1829 = vadd.s32 %v1577, 2147483648
        %vm1831 = vcmp.ge.s32.totalorder %v1829, 2576980377
        %v1832 = vadd.s32 %v1578, 2147483648
        %vm1834 = vcmp.ge.s32.totalorder %v1832, 2576980377
        %v1835 = vadd.s32 %v1579, 2147483648
        %vm1837 = vcmp.ge.s32.totalorder %v1835, 2576980377
        %v1838 = vadd.s32 %v1580, 2147483648
        %vm1840 = vcmp.ge.s32.totalorder %v1838, 2576980377
        %v1841 = vadd.s32 %v1581, 2147483648
        %vm1843 = vcmp.ge.s32.totalorder %v1841, 2576980377
        %v1844 = vadd.s32 %v1582, 2147483648
        %vm1846 = vcmp.ge.s32.totalorder %v1844, 2576980377
        %v1847 = vadd.s32 %v1583, 2147483648
        %vm1849 = vcmp.ge.s32.totalorder %v1847, 2576980377
        %v1850 = vadd.s32 %v1584, 2147483648
        %vm1852 = vcmp.ge.s32.totalorder %v1850, 2576980377
        %v1853 = vadd.s32 %v1585, 2147483648
        %vm1855 = vcmp.ge.s32.totalorder %v1853, 2576980377
        %v1856 = vadd.s32 %v1586, 2147483648
        %vm1858 = vcmp.ge.s32.totalorder %v1856, 2576980377
        %v1859 = vadd.s32 %v1587, 2147483648
        %vm1861 = vcmp.ge.s32.totalorder %v1859, 2576980377
        %v1862 = vadd.s32 %v1588, 2147483648
        %vm1864 = vcmp.ge.s32.totalorder %v1862, 2576980377
        %v1865 = vadd.s32 %v1589, 2147483648
        %vm1867 = vcmp.ge.s32.totalorder %v1865, 2576980377
        %v1868 = vadd.s32 %v1590, 2147483648
        %vm1870 = vcmp.ge.s32.totalorder %v1868, 2576980377
        %v1871 = vadd.s32 %v1591, 2147483648
        %vm1873 = vcmp.ge.s32.totalorder %v1871, 2576980377
        %v1874 = vadd.s32 %v1592, 2147483648
        %vm1876 = vcmp.ge.s32.totalorder %v1874, 2576980377
        %v1877 = vadd.s32 %v1593, 2147483648
        %vm1879 = vcmp.ge.s32.totalorder %v1877, 2576980377
        %v1880 = vadd.s32 %v1594, 2147483648
        %vm1882 = vcmp.ge.s32.totalorder %v1880, 2576980377
        %v1883 = vadd.s32 %v1595, 2147483648
        %vm1885 = vcmp.ge.s32.totalorder %v1883, 2576980377
        %v1886 = vadd.s32 %v1596, 2147483648
        %vm1888 = vcmp.ge.s32.totalorder %v1886, 2576980377
        %v1889 = vadd.s32 %v1597, 2147483648
        %vm1891 = vcmp.ge.s32.totalorder %v1889, 2576980377
        %v1892 = vadd.s32 %v1598, 2147483648
        %vm1894 = vcmp.ge.s32.totalorder %v1892, 2576980377
        %v1895 = vadd.s32 %v1599, 2147483648
        %vm1897 = vcmp.ge.s32.totalorder %v1895, 2576980377
        %v1898 = vadd.s32 %v1600, 2147483648
        %vm1900 = vcmp.ge.s32.totalorder %v1898, 2576980377
        %v1901 = vadd.s32 %v1601, 2147483648
        %vm1903 = vcmp.ge.s32.totalorder %v1901, 2576980377
        %v1904 = vadd.s32 %v1602, 2147483648
        %vm1906 = vcmp.ge.s32.totalorder %v1904, 2576980377
        %v1907 = vadd.s32 %v1603, 2147483648
        %vm1909 = vcmp.ge.s32.totalorder %v1907, 2576980377
        %v1910 = vadd.s32 %v1604, 2147483648
        %vm1912 = vcmp.ge.s32.totalorder %v1910, 2576980377
        %v1913 = vadd.s32 %v1605, 2147483648
        %vm1915 = vcmp.ge.s32.totalorder %v1913, 2576980377
        %v1916 = vadd.s32 %v1606, 2147483648
        %vm1918 = vcmp.ge.s32.totalorder %v1916, 2576980377
        %v1919 = vadd.s32 %v1607, 2147483648
        %vm1921 = vcmp.ge.s32.totalorder %v1919, 2576980377
        %v1922 = vadd.s32 %v1608, 2147483648
        %vm1924 = vcmp.ge.s32.totalorder %v1922, 2576980377
        %v1925 = vadd.s32 %v1609, 2147483648
        %vm1927 = vcmp.ge.s32.totalorder %v1925, 2576980377
        %v1928 = vadd.s32 %v1610, 2147483648
        %vm1930 = vcmp.ge.s32.totalorder %v1928, 2576980377
        %v1931 = vadd.s32 %v1611, 2147483648
        %vm1933 = vcmp.ge.s32.totalorder %v1931, 2576980377
        %v1934 = vadd.s32 %v1612, 2147483648
        %vm1936 = vcmp.ge.s32.totalorder %v1934, 2576980377
        %v1937 = vadd.s32 %v1613, 2147483648
        %vm1939 = vcmp.ge.s32.totalorder %v1937, 2576980377
        %v1940 = vadd.s32 %v1614, 2147483648
        %vm1942 = vcmp.ge.s32.totalorder %v1940, 2576980377
        %v1943 = vadd.s32 %v1615, 2147483648
        %vm1945 = vcmp.ge.s32.totalorder %v1943, 2576980377
        %v1946 = vadd.s32 %v1616, 2147483648
        %vm1948 = vcmp.ge.s32.totalorder %v1946, 2576980377
        %v1949 = vadd.s32 %v1617, 2147483648
        %vm1951 = vcmp.ge.s32.totalorder %v1949, 2576980377
        %v1952 = vadd.s32 %v1618, 2147483648
        %vm1954 = vcmp.ge.s32.totalorder %v1952, 2576980377
        %v1955 = vadd.s32 %v1619, 2147483648
        %vm1957 = vcmp.ge.s32.totalorder %v1955, 2576980377
        %v1958 = vadd.s32 %v1620, 2147483648
        %vm1960 = vcmp.ge.s32.totalorder %v1958, 2576980377
        %v1961 = vadd.s32 %v1621, 2147483648
        %vm1963 = vcmp.ge.s32.totalorder %v1961, 2576980377
        %v1964 = vadd.s32 %v1622, 2147483648
        %vm1966 = vcmp.ge.s32.totalorder %v1964, 2576980377
        %v1967 = vadd.s32 %v1623, 2147483648
        %vm1969 = vcmp.ge.s32.totalorder %v1967, 2576980377
        %v1970 = vadd.s32 %v1624, 2147483648
        %vm1972 = vcmp.ge.s32.totalorder %v1970, 2576980377
        %v1973 = vadd.s32 %v1625, 2147483648
        %vm1975 = vcmp.ge.s32.totalorder %v1973, 2576980377
        %v1976 = vadd.s32 %v1626, 2147483648
        %vm1978 = vcmp.ge.s32.totalorder %v1976, 2576980377
        %v1979 = vadd.s32 %v1627, 2147483648
        %vm1981 = vcmp.ge.s32.totalorder %v1979, 2576980377
        %v1982 = vadd.s32 %v1628, 2147483648
        %vm1984 = vcmp.ge.s32.totalorder %v1982, 2576980377
        %v1985 = vadd.s32 %v1629, 2147483648
        %vm1987 = vcmp.ge.s32.totalorder %v1985, 2576980377
        %v1988 = vadd.s32 %v1630, 2147483648
        %vm1990 = vcmp.ge.s32.totalorder %v1988, 2576980377
        %v1991 = vadd.s32 %v1631, 2147483648
        %vm1993 = vcmp.ge.s32.totalorder %v1991, 2576980377
        %v1994 = vadd.s32 %v1632, 2147483648
        %vm1996 = vcmp.ge.s32.totalorder %v1994, 2576980377
        %v1997 = vadd.s32 %v1633, 2147483648
        %vm1999 = vcmp.ge.s32.totalorder %v1997, 2576980377
        %v2000 = vadd.s32 %v1634, 2147483648
        %vm2002 = vcmp.ge.s32.totalorder %v2000, 2576980377
        %v2003 = vadd.s32 %v1635, 2147483648
        %vm2005 = vcmp.ge.s32.totalorder %v2003, 2576980377
        %v2006 = vadd.s32 %v1636, 2147483648
        %vm2008 = vcmp.ge.s32.totalorder %v2006, 2576980377
        %v2009 = vadd.s32 %v1637, 2147483648
        %vm2011 = vcmp.ge.s32.totalorder %v2009, 2576980377
        %v2012 = vadd.s32 %v1638, 2147483648
        %vm2014 = vcmp.ge.s32.totalorder %v2012, 2576980377
        %v2015 = vadd.s32 %v1639, 2147483648
        %vm2017 = vcmp.ge.s32.totalorder %v2015, 2576980377
        %v2018 = vadd.s32 %v1640, 2147483648
        %vm2020 = vcmp.ge.s32.totalorder %v2018, 2576980377
        %v2021 = vadd.s32 %v1641, 2147483648
        %vm2023 = vcmp.ge.s32.totalorder %v2021, 2576980377
        %v2024 = vadd.s32 %v1642, 2147483648
        %vm2026 = vcmp.ge.s32.totalorder %v2024, 2576980377
        %v2027 = vadd.s32 %v1643, 2147483648
        %vm2029 = vcmp.ge.s32.totalorder %v2027, 2576980377
        %v2030 = vadd.s32 %v1644, 2147483648
        %vm2032 = vcmp.ge.s32.totalorder %v2030, 2576980377
        %v2033 = vadd.s32 %v1645, 2147483648
        %vm2035 = vcmp.ge.s32.totalorder %v2033, 2576980377
        %v2036 = vadd.s32 %v1646, 2147483648
        %vm2038 = vcmp.ge.s32.totalorder %v2036, 2576980377
        %v2039 = vadd.s32 %v1647, 2147483648
        %vm2041 = vcmp.ge.s32.totalorder %v2039, 2576980377
        %v2042 = vadd.s32 %v1648, 2147483648
        %vm2044 = vcmp.ge.s32.totalorder %v2042, 2576980377
        %v2045 = vadd.s32 %v1649, 2147483648
        %vm2047 = vcmp.ge.s32.totalorder %v2045, 2576980377
        %v2048 = vadd.s32 %v1650, 2147483648
        %vm2050 = vcmp.ge.s32.totalorder %v2048, 2576980377
        %v2051 = vadd.s32 %v1651, 2147483648
        %vm2053 = vcmp.ge.s32.totalorder %v2051, 2576980377
        %v2054 = vadd.s32 %v1652, 2147483648
        %vm2056 = vcmp.ge.s32.totalorder %v2054, 2576980377
        %v2057 = vadd.s32 %v1653, 2147483648
        %vm2059 = vcmp.ge.s32.totalorder %v2057, 2576980377
        %v2060 = vadd.s32 %v1654, 2147483648
        %vm2062 = vcmp.ge.s32.totalorder %v2060, 2576980377
        %v2063 = vadd.s32 %v1655, 2147483648
        %vm2065 = vcmp.ge.s32.totalorder %v2063, 2576980377
        %v2066 = vadd.s32 %v1656, 2147483648
        %vm2068 = vcmp.ge.s32.totalorder %v2066, 2576980377
        %v2069 = vadd.s32 %v1657, 2147483648
        %vm2071 = vcmp.ge.s32.totalorder %v2069, 2576980377
        %v2072 = vadd.s32 %v1658, 2147483648
        %vm2074 = vcmp.ge.s32.totalorder %v2072, 2576980377
        %v2075 = vadd.s32 %v1659, 2147483648
        %vm2077 = vcmp.ge.s32.totalorder %v2075, 2576980377
        %v2078 = vadd.s32 %v1660, 2147483648
        %vm2080 = vcmp.ge.s32.totalorder %v2078, 2576980377
        %v2081 = vadd.s32 %v1661, 2147483648
        %vm2083 = vcmp.ge.s32.totalorder %v2081, 2576980377
        %v2084 = vadd.s32 %v1662, 2147483648
        %vm2086 = vcmp.ge.s32.totalorder %v2084, 2576980377
        %v2087 = vadd.s32 %v1663, 2147483648
        %vm2089 = vcmp.ge.s32.totalorder %v2087, 2576980377
        %v2090 = vadd.s32 %v1664, 2147483648
        %vm2092 = vcmp.ge.s32.totalorder %v2090, 2576980377
        %v2093 = vadd.s32 %v1665, 2147483648
        %vm2095 = vcmp.ge.s32.totalorder %v2093, 2576980377
        %v2096 = vadd.s32 %v1666, 2147483648
        %vm2098 = vcmp.ge.s32.totalorder %v2096, 2576980377
        %v2099 = vld [vmem:[%s120] sm:$0xff]
        %v2100 = vld [vmem:[%s120 + $0x8] sm:$0xff]
        %v2101 = vld [vmem:[%s120 + $0x10] sm:$0xff]
        %v2102 = vld [vmem:[%s120 + $0x18] sm:$0xff]
        %v2103 = vld [vmem:[%s120 + $0x20] sm:$0xff]
        %v2104 = vld [vmem:[%s120 + $0x28] sm:$0xff]
        %v2105 = vld [vmem:[%s120 + $0x30] sm:$0xff]
        %v2106 = vld [vmem:[%s120 + $0x38] sm:$0xff]
        %v2107 = vld [vmem:[%s120 + $0x40] sm:$0xff]
        %v2108 = vld [vmem:[%s120 + $0x48] sm:$0xff]
        %v2109 = vld [vmem:[%s120 + $0x50] sm:$0xff]
        %v2110 = vld [vmem:[%s120 + $0x58] sm:$0xff]
        %v2111 = vld [vmem:[%s120 + $0x60] sm:$0xff]
        %v2112 = vld [vmem:[%s120 + $0x68] sm:$0xff]
        %v2113 = vld [vmem:[%s120 + $0x70] sm:$0xff]
        %v2114 = vld [vmem:[%s120 + $0x78] sm:$0xff]
        %v2115 = vld [vmem:[%s120 + $0x80] sm:$0xff]
        %v2116 = vld [vmem:[%s120 + $0x88] sm:$0xff]
        %v2117 = vld [vmem:[%s120 + $0x90] sm:$0xff]
        %v2118 = vld [vmem:[%s120 + $0x98] sm:$0xff]
        %v2119 = vld [vmem:[%s120 + $0xa0] sm:$0xff]
        %v2120 = vld [vmem:[%s120 + $0xa8] sm:$0xff]
        %v2121 = vld [vmem:[%s120 + $0xb0] sm:$0xff]
        %v2122 = vld [vmem:[%s120 + $0xb8] sm:$0xff]
        %v2123 = vld [vmem:[%s120 + $0xc0] sm:$0xff]
        %v2124 = vld [vmem:[%s120 + $0xc8] sm:$0xff]
        %v2125 = vld [vmem:[%s120 + $0xd0] sm:$0xff]
        %v2126 = vld [vmem:[%s120 + $0xd8] sm:$0xff]
        %v2127 = vld [vmem:[%s120 + $0xe0] sm:$0xff]
        %v2128 = vld [vmem:[%s120 + $0xe8] sm:$0xff]
        %v2129 = vld [vmem:[%s120 + $0xf0] sm:$0xff]
        %v2130 = vld [vmem:[%s120 + $0xf8] sm:$0xff]
        %v2131 = vld [vmem:[%s120 + $0x100] sm:$0xff]
        %v2132 = vld [vmem:[%s120 + $0x108] sm:$0xff]
        %v2133 = vld [vmem:[%s120 + $0x110] sm:$0xff]
        %v2134 = vld [vmem:[%s120 + $0x118] sm:$0xff]
        %v2135 = vld [vmem:[%s120 + $0x120] sm:$0xff]
        %v2136 = vld [vmem:[%s120 + $0x128] sm:$0xff]
        %v2137 = vld [vmem:[%s120 + $0x130] sm:$0xff]
        %v2138 = vld [vmem:[%s120 + $0x138] sm:$0xff]
        %v2139 = vld [vmem:[%s120 + $0x140] sm:$0xff]
        %v2140 = vld [vmem:[%s120 + $0x148] sm:$0xff]
        %v2141 = vld [vmem:[%s120 + $0x150] sm:$0xff]
        %v2142 = vld [vmem:[%s120 + $0x158] sm:$0xff]
        %v2143 = vld [vmem:[%s120 + $0x160] sm:$0xff]
        %v2144 = vld [vmem:[%s120 + $0x168] sm:$0xff]
        %v2145 = vld [vmem:[%s120 + $0x170] sm:$0xff]
        %v2146 = vld [vmem:[%s120 + $0x178] sm:$0xff]
        %v2147 = vld [vmem:[%s120 + $0x180] sm:$0xff]
        %v2148 = vld [vmem:[%s120 + $0x188] sm:$0xff]
        %v2149 = vld [vmem:[%s120 + $0x190] sm:$0xff]
        %v2150 = vld [vmem:[%s120 + $0x198] sm:$0xff]
        %v2151 = vld [vmem:[%s120 + $0x1a0] sm:$0xff]
        %v2152 = vld [vmem:[%s120 + $0x1a8] sm:$0xff]
        %v2153 = vld [vmem:[%s120 + $0x1b0] sm:$0xff]
        %v2154 = vld [vmem:[%s120 + $0x1b8] sm:$0xff]
        %v2155 = vld [vmem:[%s120 + $0x1c0] sm:$0xff]
        %v2156 = vld [vmem:[%s120 + $0x1c8] sm:$0xff]
        %v2157 = vld [vmem:[%s120 + $0x1d0] sm:$0xff]
        %v2158 = vld [vmem:[%s120 + $0x1d8] sm:$0xff]
        %v2159 = vld [vmem:[%s120 + $0x1e0] sm:$0xff]
        %v2160 = vld [vmem:[%s120 + $0x1e8] sm:$0xff]
        %v2161 = vld [vmem:[%s120 + $0x1f0] sm:$0xff]
        %v2162 = vld [vmem:[%s120 + $0x1f8] sm:$0xff]
        %v2163 = vld [vmem:[%s120 + $0x200] sm:$0xff]
        %v2164 = vld [vmem:[%s120 + $0x208] sm:$0xff]
        %v2165 = vld [vmem:[%s120 + $0x210] sm:$0xff]
        %v2166 = vld [vmem:[%s120 + $0x218] sm:$0xff]
        %v2167 = vld [vmem:[%s120 + $0x220] sm:$0xff]
        %v2168 = vld [vmem:[%s120 + $0x228] sm:$0xff]
        %v2169 = vld [vmem:[%s120 + $0x230] sm:$0xff]
        %v2170 = vld [vmem:[%s120 + $0x238] sm:$0xff]
        %v2171 = vld [vmem:[%s120 + $0x240] sm:$0xff]
        %v2172 = vld [vmem:[%s120 + $0x248] sm:$0xff]
        %v2173 = vld [vmem:[%s120 + $0x250] sm:$0xff]
        %v2174 = vld [vmem:[%s120 + $0x258] sm:$0xff]
        %v2175 = vld [vmem:[%s120 + $0x260] sm:$0xff]
        %v2176 = vld [vmem:[%s120 + $0x268] sm:$0xff]
        %v2177 = vld [vmem:[%s120 + $0x270] sm:$0xff]
        %v2178 = vld [vmem:[%s120 + $0x278] sm:$0xff]
        %v2179 = vld [vmem:[%s120 + $0x280] sm:$0xff]
        %v2180 = vld [vmem:[%s120 + $0x288] sm:$0xff]
        %v2181 = vld [vmem:[%s120 + $0x290] sm:$0xff]
        %v2182 = vld [vmem:[%s120 + $0x298] sm:$0xff]
        %v2183 = vld [vmem:[%s120 + $0x2a0] sm:$0xff]
        %v2184 = vld [vmem:[%s120 + $0x2a8] sm:$0xff]
        %v2185 = vld [vmem:[%s120 + $0x2b0] sm:$0xff]
        %v2186 = vld [vmem:[%s120 + $0x2b8] sm:$0xff]
        %v2187 = vld [vmem:[%s120 + $0x2c0] sm:$0xff]
        %v2188 = vld [vmem:[%s120 + $0x2c8] sm:$0xff]
        %v2189 = vld [vmem:[%s120 + $0x2d0] sm:$0xff]
        %v2190 = vld [vmem:[%s120 + $0x2d8] sm:$0xff]
        %v2191 = vld [vmem:[%s120 + $0x2e0] sm:$0xff]
        %v2192 = vld [vmem:[%s120 + $0x2e8] sm:$0xff]
        %v2193 = vld [vmem:[%s120 + $0x2f0] sm:$0xff]
        %v2194 = vld [vmem:[%s120 + $0x2f8] sm:$0xff]
        %v2195 = vld [vmem:[%s120 + $0x300] sm:$0xff]
        %v2196 = vld [vmem:[%s120 + $0x308] sm:$0xff]
        %v2197 = vld [vmem:[%s120 + $0x310] sm:$0xff]
        %v2198 = vld [vmem:[%s120 + $0x318] sm:$0xff]
        %v2199 = vld [vmem:[%s120 + $0x320] sm:$0xff]
        %v2200 = vld [vmem:[%s120 + $0x328] sm:$0xff]
        %v2201 = vld [vmem:[%s120 + $0x330] sm:$0xff]
        %v2202 = vld [vmem:[%s120 + $0x338] sm:$0xff]
        %v2203 = vld [vmem:[%s120 + $0x340] sm:$0xff]
        %v2204 = vld [vmem:[%s120 + $0x348] sm:$0xff]
        %v2205 = vld [vmem:[%s120 + $0x350] sm:$0xff]
        %v2206 = vld [vmem:[%s120 + $0x358] sm:$0xff]
        %v2207 = vld [vmem:[%s120 + $0x360] sm:$0xff]
        %v2208 = vld [vmem:[%s120 + $0x368] sm:$0xff]
        %v2209 = vld [vmem:[%s120 + $0x370] sm:$0xff]
        %v2210 = vld [vmem:[%s120 + $0x378] sm:$0xff]
        %v2211 = vld [vmem:[%s120 + $0x380] sm:$0xff]
        %v2212 = vld [vmem:[%s120 + $0x388] sm:$0xff]
        %v2213 = vld [vmem:[%s120 + $0x390] sm:$0xff]
        %v2214 = vld [vmem:[%s120 + $0x398] sm:$0xff]
        %v2215 = vld [vmem:[%s120 + $0x3a0] sm:$0xff]
        %v2216 = vld [vmem:[%s120 + $0x3a8] sm:$0xff]
        %v2217 = vld [vmem:[%s120 + $0x3b0] sm:$0xff]
        %v2218 = vld [vmem:[%s120 + $0x3b8] sm:$0xff]
        %v2219 = vld [vmem:[%s120 + $0x3c0] sm:$0xff]
        %v2220 = vld [vmem:[%s120 + $0x3c8] sm:$0xff]
        %v2221 = vld [vmem:[%s120 + $0x3d0] sm:$0xff]
        %v2222 = vld [vmem:[%s120 + $0x3d8] sm:$0xff]
        %v2223 = vld [vmem:[%s120 + $0x3e0] sm:$0xff]
        %v2224 = vld [vmem:[%s120 + $0x3e8] sm:$0xff]
        %v2225 = vld [vmem:[%s120 + $0x3f0] sm:$0xff]
        %v2226 = vld [vmem:[%s120 + $0x3f8] sm:$0xff]
        %v2227 = vld [vmem:[%s120 + $0x400] sm:$0xff]
        %v2228 = vld [vmem:[%s120 + $0x408] sm:$0xff]
        %v2229 = vld [vmem:[%s120 + $0x410] sm:$0xff]
        %v2230 = vld [vmem:[%s120 + $0x418] sm:$0xff]
        %v2231 = vld [vmem:[%s120 + $0x420] sm:$0xff]
        %v2232 = vld [vmem:[%s120 + $0x428] sm:$0xff]
        %v2233 = vld [vmem:[%s120 + $0x430] sm:$0xff]
        %v2234 = vld [vmem:[%s120 + $0x438] sm:$0xff]
        %v2235 = vld [vmem:[%s120 + $0x440] sm:$0xff]
        %v2236 = vld [vmem:[%s120 + $0x448] sm:$0xff]
        %v2237 = vld [vmem:[%s120 + $0x450] sm:$0xff]
        %v2238 = vld [vmem:[%s120 + $0x458] sm:$0xff]
        %v2239 = vld [vmem:[%s120 + $0x460] sm:$0xff]
        %v2240 = vld [vmem:[%s120 + $0x468] sm:$0xff]
        %v2241 = vld [vmem:[%s120 + $0x470] sm:$0xff]
        %v2242 = vld [vmem:[%s120 + $0x478] sm:$0xff]
        %v2243 = vmul.f32 %v2099, 1.1111112
        %v2244 = vmul.f32 %v2100, 1.1111112
        %v2245 = vmul.f32 %v2101, 1.1111112
        %v2246 = vmul.f32 %v2102, 1.1111112
        %v2247 = vmul.f32 %v2103, 1.1111112
        %v2248 = vmul.f32 %v2104, 1.1111112
        %v2249 = vmul.f32 %v2105, 1.1111112
        %v2250 = vmul.f32 %v2106, 1.1111112
        %v2251 = vmul.f32 %v2107, 1.1111112
        %v2252 = vmul.f32 %v2108, 1.1111112
        %v2253 = vmul.f32 %v2109, 1.1111112
        %v2254 = vmul.f32 %v2110, 1.1111112
        %v2255 = vmul.f32 %v2111, 1.1111112
        %v2256 = vmul.f32 %v2112, 1.1111112
        %v2257 = vmul.f32 %v2113, 1.1111112
        %v2258 = vmul.f32 %v2114, 1.1111112
        %v2259 = vmul.f32 %v2115, 1.1111112
        %v2260 = vmul.f32 %v2116, 1.1111112
        %v2261 = vmul.f32 %v2117, 1.1111112
        %v2262 = vmul.f32 %v2118, 1.1111112
        %v2263 = vmul.f32 %v2119, 1.1111112
        %v2264 = vmul.f32 %v2120, 1.1111112
        %v2265 = vmul.f32 %v2121, 1.1111112
        %v2266 = vmul.f32 %v2122, 1.1111112
        %v2267 = vmul.f32 %v2123, 1.1111112
        %v2268 = vmul.f32 %v2124, 1.1111112
        %v2269 = vmul.f32 %v2125, 1.1111112
        %v2270 = vmul.f32 %v2126, 1.1111112
        %v2271 = vmul.f32 %v2127, 1.1111112
        %v2272 = vmul.f32 %v2128, 1.1111112
        %v2273 = vmul.f32 %v2129, 1.1111112
        %v2274 = vmul.f32 %v2130, 1.1111112
        %v2275 = vmul.f32 %v2131, 1.1111112
        %v2276 = vmul.f32 %v2132, 1.1111112
        %v2277 = vmul.f32 %v2133, 1.1111112
        %v2278 = vmul.f32 %v2134, 1.1111112
        %v2279 = vmul.f32 %v2135, 1.1111112
        %v2280 = vmul.f32 %v2136, 1.1111112
        %v2281 = vmul.f32 %v2137, 1.1111112
        %v2282 = vmul.f32 %v2138, 1.1111112
        %v2283 = vmul.f32 %v2139, 1.1111112
        %v2284 = vmul.f32 %v2140, 1.1111112
        %v2285 = vmul.f32 %v2141, 1.1111112
        %v2286 = vmul.f32 %v2142, 1.1111112
        %v2287 = vmul.f32 %v2143, 1.1111112
        %v2288 = vmul.f32 %v2144, 1.1111112
        %v2289 = vmul.f32 %v2145, 1.1111112
        %v2290 = vmul.f32 %v2146, 1.1111112
        %v2291 = vmul.f32 %v2147, 1.1111112
        %v2292 = vmul.f32 %v2148, 1.1111112
        %v2293 = vmul.f32 %v2149, 1.1111112
        %v2294 = vmul.f32 %v2150, 1.1111112
        %v2295 = vmul.f32 %v2151, 1.1111112
        %v2296 = vmul.f32 %v2152, 1.1111112
        %v2297 = vmul.f32 %v2153, 1.1111112
        %v2298 = vmul.f32 %v2154, 1.1111112
        %v2299 = vmul.f32 %v2155, 1.1111112
        %v2300 = vmul.f32 %v2156, 1.1111112
        %v2301 = vmul.f32 %v2157, 1.1111112
        %v2302 = vmul.f32 %v2158, 1.1111112
        %v2303 = vmul.f32 %v2159, 1.1111112
        %v2304 = vmul.f32 %v2160, 1.1111112
        %v2305 = vmul.f32 %v2161, 1.1111112
        %v2306 = vmul.f32 %v2162, 1.1111112
        %v2307 = vmul.f32 %v2163, 1.1111112
        %v2308 = vmul.f32 %v2164, 1.1111112
        %v2309 = vmul.f32 %v2165, 1.1111112
        %v2310 = vmul.f32 %v2166, 1.1111112
        %v2311 = vmul.f32 %v2167, 1.1111112
        %v2312 = vmul.f32 %v2168, 1.1111112
        %v2313 = vmul.f32 %v2169, 1.1111112
        %v2314 = vmul.f32 %v2170, 1.1111112
        %v2315 = vmul.f32 %v2171, 1.1111112
        %v2316 = vmul.f32 %v2172, 1.1111112
        %v2317 = vmul.f32 %v2173, 1.1111112
        %v2318 = vmul.f32 %v2174, 1.1111112
        %v2319 = vmul.f32 %v2175, 1.1111112
        %v2320 = vmul.f32 %v2176, 1.1111112
        %v2321 = vmul.f32 %v2177, 1.1111112
        %v2322 = vmul.f32 %v2178, 1.1111112
        %v2323 = vmul.f32 %v2179, 1.1111112
        %v2324 = vmul.f32 %v2180, 1.1111112
        %v2325 = vmul.f32 %v2181, 1.1111112
        %v2326 = vmul.f32 %v2182, 1.1111112
        %v2327 = vmul.f32 %v2183, 1.1111112
        %v2328 = vmul.f32 %v2184, 1.1111112
        %v2329 = vmul.f32 %v2185, 1.1111112
        %v2330 = vmul.f32 %v2186, 1.1111112
        %v2331 = vmul.f32 %v2187, 1.1111112
        %v2332 = vmul.f32 %v2188, 1.1111112
        %v2333 = vmul.f32 %v2189, 1.1111112
        %v2334 = vmul.f32 %v2190, 1.1111112
        %v2335 = vmul.f32 %v2191, 1.1111112
        %v2336 = vmul.f32 %v2192, 1.1111112
        %v2337 = vmul.f32 %v2193, 1.1111112
        %v2338 = vmul.f32 %v2194, 1.1111112
        %v2339 = vmul.f32 %v2195, 1.1111112
        %v2340 = vmul.f32 %v2196, 1.1111112
        %v2341 = vmul.f32 %v2197, 1.1111112
        %v2342 = vmul.f32 %v2198, 1.1111112
        %v2343 = vmul.f32 %v2199, 1.1111112
        %v2344 = vmul.f32 %v2200, 1.1111112
        %v2345 = vmul.f32 %v2201, 1.1111112
        %v2346 = vmul.f32 %v2202, 1.1111112
        %v2347 = vmul.f32 %v2203, 1.1111112
        %v2348 = vmul.f32 %v2204, 1.1111112
        %v2349 = vmul.f32 %v2205, 1.1111112
        %v2350 = vmul.f32 %v2206, 1.1111112
        %v2351 = vmul.f32 %v2207, 1.1111112
        %v2352 = vmul.f32 %v2208, 1.1111112
        %v2353 = vmul.f32 %v2209, 1.1111112
        %v2354 = vmul.f32 %v2210, 1.1111112
        %v2355 = vmul.f32 %v2211, 1.1111112
        %v2356 = vmul.f32 %v2212, 1.1111112
        %v2357 = vmul.f32 %v2213, 1.1111112
        %v2358 = vmul.f32 %v2214, 1.1111112
        %v2359 = vmul.f32 %v2215, 1.1111112
        %v2360 = vmul.f32 %v2216, 1.1111112
        %v2361 = vmul.f32 %v2217, 1.1111112
        %v2362 = vmul.f32 %v2218, 1.1111112
        %v2363 = vmul.f32 %v2219, 1.1111112
        %v2364 = vmul.f32 %v2220, 1.1111112
        %v2365 = vmul.f32 %v2221, 1.1111112
        %v2366 = vmul.f32 %v2222, 1.1111112
        %v2367 = vmul.f32 %v2223, 1.1111112
        %v2368 = vmul.f32 %v2224, 1.1111112
        %v2369 = vmul.f32 %v2225, 1.1111112
        %v2370 = vmul.f32 %v2226, 1.1111112
        %v2371 = vmul.f32 %v2227, 1.1111112
        %v2372 = vmul.f32 %v2228, 1.1111112
        %v2373 = vmul.f32 %v2229, 1.1111112
        %v2374 = vmul.f32 %v2230, 1.1111112
        %v2375 = vmul.f32 %v2231, 1.1111112
        %v2376 = vmul.f32 %v2232, 1.1111112
        %v2377 = vmul.f32 %v2233, 1.1111112
        %v2378 = vmul.f32 %v2234, 1.1111112
        %v2379 = vmul.f32 %v2235, 1.1111112
        %v2380 = vmul.f32 %v2236, 1.1111112
        %v2381 = vmul.f32 %v2237, 1.1111112
        %v2382 = vmul.f32 %v2238, 1.1111112
        %v2383 = vmul.f32 %v2239, 1.1111112
        %v2384 = vmul.f32 %v2240, 1.1111112
        %v2385 = vmul.f32 %v2241, 1.1111112
        %v2386 = vmul.f32 %v2242, 1.1111112
        %v2387 = vsel %vm1669, %v2243, 0.0
        %v2388 = vsel %vm1672, %v2244, 0.0
        %v2389 = vsel %vm1675, %v2245, 0.0
        %v2390 = vsel %vm1678, %v2246, 0.0
        %v2391 = vsel %vm1681, %v2247, 0.0
        %v2392 = vsel %vm1684, %v2248, 0.0
        %v2393 = vsel %vm1687, %v2249, 0.0
        %v2394 = vsel %vm1690, %v2250, 0.0
        %v2395 = vsel %vm1693, %v2251, 0.0
        %v2396 = vsel %vm1696, %v2252, 0.0
        %v2397 = vsel %vm1699, %v2253, 0.0
        %v2398 = vsel %vm1702, %v2254, 0.0
        %v2399 = vsel %vm1705, %v2255, 0.0
        %v2400 = vsel %vm1708, %v2256, 0.0
        %v2401 = vsel %vm1711, %v2257, 0.0
        %v2402 = vsel %vm1714, %v2258, 0.0
        %v2403 = vsel %vm1717, %v2259, 0.0
        %v2404 = vsel %vm1720, %v2260, 0.0
        %v2405 = vsel %vm1723, %v2261, 0.0
        %v2406 = vsel %vm1726, %v2262, 0.0
        %v2407 = vsel %vm1729, %v2263, 0.0
        %v2408 = vsel %vm1732, %v2264, 0.0
        %v2409 = vsel %vm1735, %v2265, 0.0
        %v2410 = vsel %vm1738, %v2266, 0.0
        %v2411 = vsel %vm1741, %v2267, 0.0
        %v2412 = vsel %vm1744, %v2268, 0.0
        %v2413 = vsel %vm1747, %v2269, 0.0
        %v2414 = vsel %vm1750, %v2270, 0.0
        %v2415 = vsel %vm1753, %v2271, 0.0
        %v2416 = vsel %vm1756, %v2272, 0.0
        %v2417 = vsel %vm1759, %v2273, 0.0
        %v2418 = vsel %vm1762, %v2274, 0.0
        %v2419 = vsel %vm1765, %v2275, 0.0
        %v2420 = vsel %vm1768, %v2276, 0.0
        %v2421 = vsel %vm1771, %v2277, 0.0
        %v2422 = vsel %vm1774, %v2278, 0.0
        %v2423 = vsel %vm1777, %v2279, 0.0
        %v2424 = vsel %vm1780, %v2280, 0.0
        %v2425 = vsel %vm1783, %v2281, 0.0
        %v2426 = vsel %vm1786, %v2282, 0.0
        %v2427 = vsel %vm1789, %v2283, 0.0
        %v2428 = vsel %vm1792, %v2284, 0.0
        %v2429 = vsel %vm1795, %v2285, 0.0
        %v2430 = vsel %vm1798, %v2286, 0.0
        %v2431 = vsel %vm1801, %v2287, 0.0
        %v2432 = vsel %vm1804, %v2288, 0.0
        %v2433 = vsel %vm1807, %v2289, 0.0
        %v2434 = vsel %vm1810, %v2290, 0.0
        %v2435 = vsel %vm1813, %v2291, 0.0
        %v2436 = vsel %vm1816, %v2292, 0.0
        %v2437 = vsel %vm1819, %v2293, 0.0
        %v2438 = vsel %vm1822, %v2294, 0.0
        %v2439 = vsel %vm1825, %v2295, 0.0
        %v2440 = vsel %vm1828, %v2296, 0.0
        %v2441 = vsel %vm1831, %v2297, 0.0
        %v2442 = vsel %vm1834, %v2298, 0.0
        %v2443 = vsel %vm1837, %v2299, 0.0
        %v2444 = vsel %vm1840, %v2300, 0.0
        %v2445 = vsel %vm1843, %v2301, 0.0
        %v2446 = vsel %vm1846, %v2302, 0.0
        %v2447 = vsel %vm1849, %v2303, 0.0
        %v2448 = vsel %vm1852, %v2304, 0.0
        %v2449 = vsel %vm1855, %v2305, 0.0
        %v2450 = vsel %vm1858, %v2306, 0.0
        %v2451 = vsel %vm1861, %v2307, 0.0
        %v2452 = vsel %vm1864, %v2308, 0.0
        %v2453 = vsel %vm1867, %v2309, 0.0
        %v2454 = vsel %vm1870, %v2310, 0.0
        %v2455 = vsel %vm1873, %v2311, 0.0
        %v2456 = vsel %vm1876, %v2312, 0.0
        %v2457 = vsel %vm1879, %v2313, 0.0
        %v2458 = vsel %vm1882, %v2314, 0.0
        %v2459 = vsel %vm1885, %v2315, 0.0
        %v2460 = vsel %vm1888, %v2316, 0.0
        %v2461 = vsel %vm1891, %v2317, 0.0
        %v2462 = vsel %vm1894, %v2318, 0.0
        %v2463 = vsel %vm1897, %v2319, 0.0
        %v2464 = vsel %vm1900, %v2320, 0.0
        %v2465 = vsel %vm1903, %v2321, 0.0
        %v2466 = vsel %vm1906, %v2322, 0.0
        %v2467 = vsel %vm1909, %v2323, 0.0
        %v2468 = vsel %vm1912, %v2324, 0.0
        %v2469 = vsel %vm1915, %v2325, 0.0
        %v2470 = vsel %vm1918, %v2326, 0.0
        %v2471 = vsel %vm1921, %v2327, 0.0
        %v2472 = vsel %vm1924, %v2328, 0.0
        %v2473 = vsel %vm1927, %v2329, 0.0
        %v2474 = vsel %vm1930, %v2330, 0.0
        %v2475 = vsel %vm1933, %v2331, 0.0
        %v2476 = vsel %vm1936, %v2332, 0.0
        %v2477 = vsel %vm1939, %v2333, 0.0
        %v2478 = vsel %vm1942, %v2334, 0.0
        %v2479 = vsel %vm1945, %v2335, 0.0
        %v2480 = vsel %vm1948, %v2336, 0.0
        %v2481 = vsel %vm1951, %v2337, 0.0
        %v2482 = vsel %vm1954, %v2338, 0.0
        %v2483 = vsel %vm1957, %v2339, 0.0
        %v2484 = vsel %vm1960, %v2340, 0.0
        %v2485 = vsel %vm1963, %v2341, 0.0
        %v2486 = vsel %vm1966, %v2342, 0.0
        %v2487 = vsel %vm1969, %v2343, 0.0
        %v2488 = vsel %vm1972, %v2344, 0.0
        %v2489 = vsel %vm1975, %v2345, 0.0
        %v2490 = vsel %vm1978, %v2346, 0.0
        %v2491 = vsel %vm1981, %v2347, 0.0
        %v2492 = vsel %vm1984, %v2348, 0.0
        %v2493 = vsel %vm1987, %v2349, 0.0
        %v2494 = vsel %vm1990, %v2350, 0.0
        %v2495 = vsel %vm1993, %v2351, 0.0
        %v2496 = vsel %vm1996, %v2352, 0.0
        %v2497 = vsel %vm1999, %v2353, 0.0
        %v2498 = vsel %vm2002, %v2354, 0.0
        %v2499 = vsel %vm2005, %v2355, 0.0
        %v2500 = vsel %vm2008, %v2356, 0.0
        %v2501 = vsel %vm2011, %v2357, 0.0
        %v2502 = vsel %vm2014, %v2358, 0.0
        %v2503 = vsel %vm2017, %v2359, 0.0
        %v2504 = vsel %vm2020, %v2360, 0.0
        %v2505 = vsel %vm2023, %v2361, 0.0
        %v2506 = vsel %vm2026, %v2362, 0.0
        %v2507 = vsel %vm2029, %v2363, 0.0
        %v2508 = vsel %vm2032, %v2364, 0.0
        %v2509 = vsel %vm2035, %v2365, 0.0
        %v2510 = vsel %vm2038, %v2366, 0.0
        %v2511 = vsel %vm2041, %v2367, 0.0
        %v2512 = vsel %vm2044, %v2368, 0.0
        %v2513 = vsel %vm2047, %v2369, 0.0
        %v2514 = vsel %vm2050, %v2370, 0.0
        %v2515 = vsel %vm2053, %v2371, 0.0
        %v2516 = vsel %vm2056, %v2372, 0.0
        %v2517 = vsel %vm2059, %v2373, 0.0
        %v2518 = vsel %vm2062, %v2374, 0.0
        %v2519 = vsel %vm2065, %v2375, 0.0
        %v2520 = vsel %vm2068, %v2376, 0.0
        %v2521 = vsel %vm2071, %v2377, 0.0
        %v2522 = vsel %vm2074, %v2378, 0.0
        %v2523 = vsel %vm2077, %v2379, 0.0
        %v2524 = vsel %vm2080, %v2380, 0.0
        %v2525 = vsel %vm2083, %v2381, 0.0
        %v2526 = vsel %vm2086, %v2382, 0.0
        %v2527 = vsel %vm2089, %v2383, 0.0
        %v2528 = vsel %vm2092, %v2384, 0.0
        %v2529 = vsel %vm2095, %v2385, 0.0
        %v2530 = vsel %vm2098, %v2386, 0.0
        %2531 = vst [vmem:[%s139] sm:$0xff] %v2387
        %2532 = vst [vmem:[%s139 + $0x8] sm:$0xff] %v2388
        %2533 = vst [vmem:[%s139 + $0x10] sm:$0xff] %v2389
        %2534 = vst [vmem:[%s139 + $0x18] sm:$0xff] %v2390
        %2535 = vst [vmem:[%s139 + $0x20] sm:$0xff] %v2391
        %2536 = vst [vmem:[%s139 + $0x28] sm:$0xff] %v2392
        %2537 = vst [vmem:[%s139 + $0x30] sm:$0xff] %v2393
        %2538 = vst [vmem:[%s139 + $0x38] sm:$0xff] %v2394
        %2539 = vst [vmem:[%s139 + $0x40] sm:$0xff] %v2395
        %2540 = vst [vmem:[%s139 + $0x48] sm:$0xff] %v2396
        %2541 = vst [vmem:[%s139 + $0x50] sm:$0xff] %v2397
        %2542 = vst [vmem:[%s139 + $0x58] sm:$0xff] %v2398
        %2543 = vst [vmem:[%s139 + $0x60] sm:$0xff] %v2399
        %2544 = vst [vmem:[%s139 + $0x68] sm:$0xff] %v2400
        %2545 = vst [vmem:[%s139 + $0x70] sm:$0xff] %v2401
        %2546 = vst [vmem:[%s139 + $0x78] sm:$0xff] %v2402
        %2547 = vst [vmem:[%s139 + $0x80] sm:$0xff] %v2403
        %2548 = vst [vmem:[%s139 + $0x88] sm:$0xff] %v2404
        %2549 = vst [vmem:[%s139 + $0x90] sm:$0xff] %v2405
        %2550 = vst [vmem:[%s139 + $0x98] sm:$0xff] %v2406
        %2551 = vst [vmem:[%s139 + $0xa0] sm:$0xff] %v2407
        %2552 = vst [vmem:[%s139 + $0xa8] sm:$0xff] %v2408
        %2553 = vst [vmem:[%s139 + $0xb0] sm:$0xff] %v2409
        %2554 = vst [vmem:[%s139 + $0xb8] sm:$0xff] %v2410
        %2555 = vst [vmem:[%s139 + $0xc0] sm:$0xff] %v2411
        %2556 = vst [vmem:[%s139 + $0xc8] sm:$0xff] %v2412
        %2557 = vst [vmem:[%s139 + $0xd0] sm:$0xff] %v2413
        %2558 = vst [vmem:[%s139 + $0xd8] sm:$0xff] %v2414
        %2559 = vst [vmem:[%s139 + $0xe0] sm:$0xff] %v2415
        %2560 = vst [vmem:[%s139 + $0xe8] sm:$0xff] %v2416
        %2561 = vst [vmem:[%s139 + $0xf0] sm:$0xff] %v2417
        %2562 = vst [vmem:[%s139 + $0xf8] sm:$0xff] %v2418
        %2563 = vst [vmem:[%s139 + $0x100] sm:$0xff] %v2419
        %2564 = vst [vmem:[%s139 + $0x108] sm:$0xff] %v2420
        %2565 = vst [vmem:[%s139 + $0x110] sm:$0xff] %v2421
        %2566 = vst [vmem:[%s139 + $0x118] sm:$0xff] %v2422
        %2567 = vst [vmem:[%s139 + $0x120] sm:$0xff] %v2423
        %2568 = vst [vmem:[%s139 + $0x128] sm:$0xff] %v2424
        %2569 = vst [vmem:[%s139 + $0x130] sm:$0xff] %v2425
        %2570 = vst [vmem:[%s139 + $0x138] sm:$0xff] %v2426
        %2571 = vst [vmem:[%s139 + $0x140] sm:$0xff] %v2427
        %2572 = vst [vmem:[%s139 + $0x148] sm:$0xff] %v2428
        %2573 = vst [vmem:[%s139 + $0x150] sm:$0xff] %v2429
        %2574 = vst [vmem:[%s139 + $0x158] sm:$0xff] %v2430
        %2575 = vst [vmem:[%s139 + $0x160] sm:$0xff] %v2431
        %2576 = vst [vmem:[%s139 + $0x168] sm:$0xff] %v2432
        %2577 = vst [vmem:[%s139 + $0x170] sm:$0xff] %v2433
        %2578 = vst [vmem:[%s139 + $0x178] sm:$0xff] %v2434
        %2579 = vst [vmem:[%s139 + $0x180] sm:$0xff] %v2435
        %2580 = vst [vmem:[%s139 + $0x188] sm:$0xff] %v2436
        %2581 = vst [vmem:[%s139 + $0x190] sm:$0xff] %v2437
        %2582 = vst [vmem:[%s139 + $0x198] sm:$0xff] %v2438
        %2583 = vst [vmem:[%s139 + $0x1a0] sm:$0xff] %v2439
        %2584 = vst [vmem:[%s139 + $0x1a8] sm:$0xff] %v2440
        %2585 = vst [vmem:[%s139 + $0x1b0] sm:$0xff] %v2441
        %2586 = vst [vmem:[%s139 + $0x1b8] sm:$0xff] %v2442
        %2587 = vst [vmem:[%s139 + $0x1c0] sm:$0xff] %v2443
        %2588 = vst [vmem:[%s139 + $0x1c8] sm:$0xff] %v2444
        %2589 = vst [vmem:[%s139 + $0x1d0] sm:$0xff] %v2445
        %2590 = vst [vmem:[%s139 + $0x1d8] sm:$0xff] %v2446
        %2591 = vst [vmem:[%s139 + $0x1e0] sm:$0xff] %v2447
        %2592 = vst [vmem:[%s139 + $0x1e8] sm:$0xff] %v2448
        %2593 = vst [vmem:[%s139 + $0x1f0] sm:$0xff] %v2449
        %2594 = vst [vmem:[%s139 + $0x1f8] sm:$0xff] %v2450
        %2595 = vst [vmem:[%s139 + $0x200] sm:$0xff] %v2451
        %2596 = vst [vmem:[%s139 + $0x208] sm:$0xff] %v2452
        %2597 = vst [vmem:[%s139 + $0x210] sm:$0xff] %v2453
        %2598 = vst [vmem:[%s139 + $0x218] sm:$0xff] %v2454
        %2599 = vst [vmem:[%s139 + $0x220] sm:$0xff] %v2455
        %2600 = vst [vmem:[%s139 + $0x228] sm:$0xff] %v2456
        %2601 = vst [vmem:[%s139 + $0x230] sm:$0xff] %v2457
        %2602 = vst [vmem:[%s139 + $0x238] sm:$0xff] %v2458
        %2603 = vst [vmem:[%s139 + $0x240] sm:$0xff] %v2459
        %2604 = vst [vmem:[%s139 + $0x248] sm:$0xff] %v2460
        %2605 = vst [vmem:[%s139 + $0x250] sm:$0xff] %v2461
        %2606 = vst [vmem:[%s139 + $0x258] sm:$0xff] %v2462
        %2607 = vst [vmem:[%s139 + $0x260] sm:$0xff] %v2463
        %2608 = vst [vmem:[%s139 + $0x268] sm:$0xff] %v2464
        %2609 = vst [vmem:[%s139 + $0x270] sm:$0xff] %v2465
        %2610 = vst [vmem:[%s139 + $0x278] sm:$0xff] %v2466
        %2611 = vst [vmem:[%s139 + $0x280] sm:$0xff] %v2467
        %2612 = vst [vmem:[%s139 + $0x288] sm:$0xff] %v2468
        %2613 = vst [vmem:[%s139 + $0x290] sm:$0xff] %v2469
        %2614 = vst [vmem:[%s139 + $0x298] sm:$0xff] %v2470
        %2615 = vst [vmem:[%s139 + $0x2a0] sm:$0xff] %v2471
        %2616 = vst [vmem:[%s139 + $0x2a8] sm:$0xff] %v2472
        %2617 = vst [vmem:[%s139 + $0x2b0] sm:$0xff] %v2473
        %2618 = vst [vmem:[%s139 + $0x2b8] sm:$0xff] %v2474
        %2619 = vst [vmem:[%s139 + $0x2c0] sm:$0xff] %v2475
        %2620 = vst [vmem:[%s139 + $0x2c8] sm:$0xff] %v2476
        %2621 = vst [vmem:[%s139 + $0x2d0] sm:$0xff] %v2477
        %2622 = vst [vmem:[%s139 + $0x2d8] sm:$0xff] %v2478
        %2623 = vst [vmem:[%s139 + $0x2e0] sm:$0xff] %v2479
        %2624 = vst [vmem:[%s139 + $0x2e8] sm:$0xff] %v2480
        %2625 = vst [vmem:[%s139 + $0x2f0] sm:$0xff] %v2481
        %2626 = vst [vmem:[%s139 + $0x2f8] sm:$0xff] %v2482
        %2627 = vst [vmem:[%s139 + $0x300] sm:$0xff] %v2483
        %2628 = vst [vmem:[%s139 + $0x308] sm:$0xff] %v2484
        %2629 = vst [vmem:[%s139 + $0x310] sm:$0xff] %v2485
        %2630 = vst [vmem:[%s139 + $0x318] sm:$0xff] %v2486
        %2631 = vst [vmem:[%s139 + $0x320] sm:$0xff] %v2487
        %2632 = vst [vmem:[%s139 + $0x328] sm:$0xff] %v2488
        %2633 = vst [vmem:[%s139 + $0x330] sm:$0xff] %v2489
        %2634 = vst [vmem:[%s139 + $0x338] sm:$0xff] %v2490
        %2635 = vst [vmem:[%s139 + $0x340] sm:$0xff] %v2491
        %2636 = vst [vmem:[%s139 + $0x348] sm:$0xff] %v2492
        %2637 = vst [vmem:[%s139 + $0x350] sm:$0xff] %v2493
        %2638 = vst [vmem:[%s139 + $0x358] sm:$0xff] %v2494
        %2639 = vst [vmem:[%s139 + $0x360] sm:$0xff] %v2495
        %2640 = vst [vmem:[%s139 + $0x368] sm:$0xff] %v2496
        %2641 = vst [vmem:[%s139 + $0x370] sm:$0xff] %v2497
        %2642 = vst [vmem:[%s139 + $0x378] sm:$0xff] %v2498
        %2643 = vst [vmem:[%s139 + $0x380] sm:$0xff] %v2499
        %2644 = vst [vmem:[%s139 + $0x388] sm:$0xff] %v2500
        %2645 = vst [vmem:[%s139 + $0x390] sm:$0xff] %v2501
        %2646 = vst [vmem:[%s139 + $0x398] sm:$0xff] %v2502
        %2647 = vst [vmem:[%s139 + $0x3a0] sm:$0xff] %v2503
        %2648 = vst [vmem:[%s139 + $0x3a8] sm:$0xff] %v2504
        %2649 = vst [vmem:[%s139 + $0x3b0] sm:$0xff] %v2505
        %2650 = vst [vmem:[%s139 + $0x3b8] sm:$0xff] %v2506
        %2651 = vst [vmem:[%s139 + $0x3c0] sm:$0xff] %v2507
        %2652 = vst [vmem:[%s139 + $0x3c8] sm:$0xff] %v2508
        %2653 = vst [vmem:[%s139 + $0x3d0] sm:$0xff] %v2509
        %2654 = vst [vmem:[%s139 + $0x3d8] sm:$0xff] %v2510
        %2655 = vst [vmem:[%s139 + $0x3e0] sm:$0xff] %v2511
        %2656 = vst [vmem:[%s139 + $0x3e8] sm:$0xff] %v2512
        %2657 = vst [vmem:[%s139 + $0x3f0] sm:$0xff] %v2513
        %2658 = vst [vmem:[%s139 + $0x3f8] sm:$0xff] %v2514
        %2659 = vst [vmem:[%s139 + $0x400] sm:$0xff] %v2515
        %2660 = vst [vmem:[%s139 + $0x408] sm:$0xff] %v2516
        %2661 = vst [vmem:[%s139 + $0x410] sm:$0xff] %v2517
        %2662 = vst [vmem:[%s139 + $0x418] sm:$0xff] %v2518
        %2663 = vst [vmem:[%s139 + $0x420] sm:$0xff] %v2519
        %2664 = vst [vmem:[%s139 + $0x428] sm:$0xff] %v2520
        %2665 = vst [vmem:[%s139 + $0x430] sm:$0xff] %v2521
        %2666 = vst [vmem:[%s139 + $0x438] sm:$0xff] %v2522
        %2667 = vst [vmem:[%s139 + $0x440] sm:$0xff] %v2523
        %2668 = vst [vmem:[%s139 + $0x448] sm:$0xff] %v2524
        %2669 = vst [vmem:[%s139 + $0x450] sm:$0xff] %v2525
        %2670 = vst [vmem:[%s139 + $0x458] sm:$0xff] %v2526
        %2671 = vst [vmem:[%s139 + $0x460] sm:$0xff] %v2527
        %2672 = vst [vmem:[%s139 + $0x468] sm:$0xff] %v2528
        %2673 = vst [vmem:[%s139 + $0x470] sm:$0xff] %v2529
        %2674 = vst [vmem:[%s139 + $0x478] sm:$0xff] %v2530
        %s2675 = sand.u32 %s54, 1
        %s2676 = scalar_lea.sflag [#allocation6], %s2675
        %s2677 = sand.u32 %s54, 1
        %s2678 = smul.addr %s2677, 1152
        %s2679 = scalar_lea.vmem [#allocation7], %s2678
        // Predicated region
        $region29: #{tpu_custom_call.1} parent=23 // pred_check
          %p2680 = pneg %p64
        $region30: #{tpu_custom_call.1} parent=23 // pred_check_branch
          %2682 = sbr.rel (%p2680) target = $region32
        $region31: #{tpu_custom_call.1} parent=23 // pred_region
          %s2683 = smul.u32 24, %s20
          %2685 = vsyncadd %s2676, 0
          %s2686 = smul.addr %s2683, 6
          %s2687 = smul.addr %s2686, 8
          %s2688 = scalar_lea.hbm %s2, %s2687
          %s2689 = sshll.u32 %s2679, 4
          %s2690 = int_to_ptr.vmem [resolvable:$true] %s2689
          %s2691 = sshll.u32 %s2688, 4
          %s2692 = int_to_ptr.hbm [resolvable:$true] %s2691
          %2697 = dma.vmem_to_hbm [thread:$0]  %s2690, 18432, %s2692, %s2676, 768, 768, 48
        $region32: #{tpu_custom_call.1} parent=23 // pred_fallthru
          _
      $region24: #{tpu_custom_call.1} parent=5 // pred_fallthru
        _
      %p2698 = scmp.le.s32.totalorder 2, %s15
      // Predicated region
      $region33: #{tpu_custom_call.1} parent=5 // pred_check
        %p2699 = pneg %p2698
      $region34: #{tpu_custom_call.1} parent=5 // pred_check_branch
        %2701 = sbr.rel (%p2699) target = $region36
      $region35: #{tpu_custom_call.1} parent=5 // pred_region
        %s2702 = ssub.s32 %s15, 2
        // Predicated region
        $region37: #{tpu_custom_call.1} parent=35 // pred_check
          %p2703 = pneg %p70
        $region38: #{tpu_custom_call.1} parent=35 // pred_check_branch
          %2705 = sbr.rel (%p2703) target = $region40
        $region39: #{tpu_custom_call.1} parent=35 // pred_region
          %s2706 = sand.u32 %s55, 1
          %s2707 = scalar_lea.sflag [#allocation6], %s2706
          %s2708 = sand.u32 %s55, 1
          %s2709 = smul.addr %s2708, 1152
          %s2710 = scalar_lea.vmem [#allocation7], %s2709
          %2712 = dma.done %s2707, 18432
        $region40: #{tpu_custom_call.1} parent=35 // pred_fallthru
          _
      $region36: #{tpu_custom_call.1} parent=5 // pred_fallthru
        _
    $region6: #{tpu_custom_call.1} parent=1 // loop_footer
      %s19 = sadd.s32 1, %s15
    $region7: #{tpu_custom_call.1} parent=1 // loop_footer_branch
      %14 = sbr.rel target = $region3
    $region8: #{tpu_custom_call.1} parent=1 // loop_exit
      _
    %2713 = vsyncpa [#allocation5], 1
    %s2714 = scalar_lea.sflag [#allocation5], 1
    %2715 = vsyncpa %s2714, 1
    %2716 = vsyncpa [#allocation6], 1
    %s2717 = scalar_lea.sflag [#allocation6], 1
    %2718 = vsyncpa %s2717, 1

</llo_original>
